<compile_context>
chip_gen: v5e
topology: v5e:2x2
jax: 0.10.0
libtpu: 0.0.40
codegen_flags: <defaults>
</compile_context>

<pallas_src>
import math
import jax
import jax.numpy as jnp
from jax.experimental import pallas as pl
from jax.experimental.pallas import tpu as pltpu

# ----------------------------- config (synthetic small encoder) ----------------
VOCAB = 64
HIDDEN = 32
N_HEADS = 2
HEAD_DIM = HIDDEN // N_HEADS
FFN = 64
N_LAYERS = 2
MAX_POS = 64
PAD_ID = 1                      # code_inputs.ne(1) -> RoBERTa padding_idx
LN_EPS = 1e-5
GEMM_DTYPE = jnp.bfloat16       # MXU operand dtype; accumulation stays f32


# ----------------------------- fused encoder kernel -----------------------------
def _encoder_kernel(x_ref, bias_ref, gemb_ref, bemb_ref,
                    wqkv_ref, bqkv_ref, wo_ref, bo_ref,
                    ln1g_ref, ln1b_ref, w1_ref, b1_ref,
                    w2_ref, b2_ref, ln2g_ref, ln2b_ref,
                    o_ref):
    B, S, H = x_ref.shape
    BS = B * S
    scale = 1.0 / math.sqrt(HEAD_DIM)

    x = x_ref[...].reshape(BS, H)                       # token-major f32 activations
    # hoisted once: (B,1,S) additive key mask -> (B,S,S); 0.0 = keep, -1e9 = pad
    bias = jnp.broadcast_to(bias_ref[...], (B, S, S))

    def layer_norm(t, g, b):
        mu = jnp.mean(t, axis=-1, keepdims=True)
        var = jnp.mean(jnp.square(t - mu), axis=-1, keepdims=True)
        return (t - mu) * jax.lax.rsqrt(var + LN_EPS) * g + b

    # embedding LayerNorm fused in as a prologue
    x = layer_norm(x, gemb_ref[...], bemb_ref[...])

    for li in range(N_LAYERS):              # static unroll; weights resident in VMEM
        w_qkv = wqkv_ref[li]                # bf16 (H, 3H) = [Wq | Wk | Wv]
        w_o = wo_ref[li]                    # bf16 (H, H)

        # ---- fused QKV projection: one MXU pass, one read of x ----
        qkv = jnp.dot(x.astype(GEMM_DTYPE), w_qkv,
                      preferred_element_type=jnp.float32) + bqkv_ref[li]   # (BS, 3H)

        # ---- per-head attention; heads merged via block-row matmuls with Wo ----
        attn = jnp.zeros((BS, H), jnp.float32)
        for h in range(N_HEADS):
            qo = h * HEAD_DIM
            q_h = (qkv[:, qo:qo + HEAD_DIM] * scale).reshape(B, S, HEAD_DIM)
            k_h = qkv[:, H + qo:H + qo + HEAD_DIM].reshape(B, S, HEAD_DIM)
            v_h = qkv[:, 2 * H + qo:2 * H + qo + HEAD_DIM].reshape(B, S, HEAD_DIM)

            s = jnp.einsum('bqd,bkd->bqk',
                           q_h.astype(GEMM_DTYPE), k_h.astype(GEMM_DTYPE),
                           preferred_element_type=jnp.float32)
            s = s + bias                                   # additive key mask
            s = s - jnp.max(s, axis=-1, keepdims=True)
            p = jnp.exp(s)
            p = p * pl.reciprocal(jnp.sum(p, axis=-1, keepdims=True), approx=True)
            ctx_h = jnp.einsum('bqk,bkd->bqd',
                               p.astype(GEMM_DTYPE), v_h.astype(GEMM_DTYPE),
                               preferred_element_type=jnp.float32
                               ).reshape(BS, HEAD_DIM)
            # concat_h(ctx_h) @ Wo  ==  sum_h ctx_h @ Wo[h*Dh:(h+1)*Dh, :]
            attn = attn + jnp.dot(ctx_h.astype(GEMM_DTYPE),
                                  w_o[qo:qo + HEAD_DIM, :],
                                  preferred_element_type=jnp.float32)

        attn = attn + bo_ref[li]
        x = layer_norm(x + attn, ln1g_ref[li], ln1b_ref[li])      # residual + LN1

        # ---- FFN with bias + GELU epilogue ----
        h1 = jnp.dot(x.astype(GEMM_DTYPE), w1_ref[li],
                     preferred_element_type=jnp.float32) + b1_ref[li]
        # TODO(synk): HF RoBERTa/CodeBERT uses exact erf GELU; tanh approximation
        # kept here (EUP tanh) for guaranteed Mosaic lowering of this encoder.
        h1 = jax.nn.gelu(h1)
        y = jnp.dot(h1.astype(GEMM_DTYPE), w2_ref[li],
                    preferred_element_type=jnp.float32) + b2_ref[li]
        x = layer_norm(x + y, ln2g_ref[li], ln2b_ref[li])         # residual + LN2

    # ---- Model.forward sigmoid head, fused as the store epilogue ----
    o_ref[...] = jax.nn.sigmoid(x).reshape(B, S, H)


def encoder_sigmoid(params, x_emb, attn_bias):
    """One pallas_call for the whole encoder + sigmoid."""
    B, S, H = x_emb.shape
    L, F = N_LAYERS, FFN

    def full(shape):
        return pl.BlockSpec(shape, lambda i, _s=shape: (0,) * len(_s))

    in_specs = [
        full((B, S, H)),                            # embeddings (f32)
        full((B, 1, S)),                            # additive attention bias (f32)
        full((1, H)), full((1, H)),                 # embedding LayerNorm
        full((L, H, 3 * H)), full((L, 1, 3 * H)),   # fused QKV (bf16 W, f32 b)
        full((L, H, H)), full((L, 1, H)),           # attention output proj
        full((L, 1, H)), full((L, 1, H)),           # LN1
        full((L, H, F)), full((L, 1, F)),           # FFN up
        full((L, F, H)), full((L, 1, H)),           # FFN down
        full((L, 1, H)), full((L, 1, H)),           # LN2
    ]

    return pl.pallas_call(
        _encoder_kernel,
        out_shape=jax.ShapeDtypeStruct((B, S, H), jnp.float32),
        grid=(1,),
        in_specs=in_specs,
        out_specs=full((B, S, H)),
        compiler_params=pltpu.CompilerParams(dimension_semantics=("arbitrary",)),
    )(x_emb, attn_bias,
      params['ln_emb_g'], params['ln_emb_b'],
      params['wqkv'], params['bqkv'], params['wo'], params['bo'],
      params['ln1_g'], params['ln1_b'], params['w1'], params['b1'],
      params['w2'], params['b2'], params['ln2_g'], params['ln2_b'])


# ----------------------------- parameter init -----------------------------------
def init_params(key):
    def nrm(k, shape, scale=0.02):
        return scale * jax.random.normal(k, shape, dtype=jnp.float32)

    ks = jax.random.split(key, 7)
    L, H, F = N_LAYERS, HIDDEN, FFN
    return {
        'word_emb': nrm(ks[0], (VOCAB, H)),
        'pos_emb': nrm(ks[1], (MAX_POS, H)),
        'tok_type_emb': nrm(ks[2], (1, H)),                     # all tokens type 0
        'ln_emb_g': jnp.ones((1, H), jnp.float32),
        'ln_emb_b': jnp.zeros((1, H), jnp.float32),
        # GEMM weights stored bf16 (MXU-native); biases / LN params stay f32.
        'wqkv': nrm(ks[3], (L, H, 3 * H)).astype(GEMM_DTYPE),   # [Wq | Wk | Wv]
        'bqkv': jnp.zeros((L, 1, 3 * H), jnp.float32),
        'wo': nrm(ks[4], (L, H, H)).astype(GEMM_DTYPE),
        'bo': jnp.zeros((L, 1, H), jnp.float32),
        'ln1_g': jnp.ones((L, 1, H), jnp.float32),
        'ln1_b': jnp.zeros((L, 1, H), jnp.float32),
        'w1': nrm(ks[5], (L, H, F)).astype(GEMM_DTYPE),
        'b1': jnp.zeros((L, 1, F), jnp.float32),
        'w2': nrm(ks[6], (L, F, H)).astype(GEMM_DTYPE),
        'b2': jnp.zeros((L, 1, H), jnp.float32),
        'ln2_g': jnp.ones((L, 1, H), jnp.float32),
        'ln2_b': jnp.zeros((L, 1, H), jnp.float32),
    }


# ----------------------------- forward pass --------------------------------------
def model_forward(params, code_inputs):
    B, S = code_inputs.shape
    # attention_mask = code_inputs.ne(1); precompute additive bias once per forward
    mask = (code_inputs != PAD_ID).astype(jnp.float32)           # (B, S), 1 = keep
    attn_bias = ((mask - 1.0) * 1e9).reshape(B, 1, S)            # 0 keep, -1e9 pad

    # RoBERTa position ids: padding_idx + cumsum(mask); pads map to padding_idx
    pos_ids = (jnp.cumsum(mask, axis=1) * mask).astype(jnp.int32) + PAD_ID

    # TODO(synk): embedding-table gathers stay in plain JAX (data-dependent gather);
    # at production scale this becomes a PrefetchScalarGridSpec row-gather kernel.
    x = (params['word_emb'][code_inputs]
         + params['pos_emb'][pos_ids]
         + params['tok_type_emb'][0][None, None, :])             # (B, S, H) f32

    return encoder_sigmoid(params, x, attn_bias)                 # sigmoid(encoder[0])


# ----------------------------- main -----------------------------------------------
if __name__ == "__main__":
    key = jax.random.PRNGKey(0)
    k_tok, k_param = jax.random.split(key)

    B, S = 2, 8
    code_inputs = jax.random.randint(k_tok, (B, S), 2, VOCAB, dtype=jnp.int32)
    # pad the tail of each sequence with token id 1 so the attention mask is exercised
    code_inputs = code_inputs.at[:, -2:].set(PAD_ID)

    params = init_params(k_param)

    out = jax.jit(model_forward)(params, code_inputs)
    out = jax.block_until_ready(out)

    assert out.shape == (B, S, HIDDEN)
    assert bool(jnp.all((out >= 0.0) & (out <= 1.0)))
    print("KERNEL_OK")
</pallas_src>

<mosaic_0001>
module attributes {stable_mosaic.version = 11 : i64} {
  func.func @_encoder_kernel(%arg0: i32, %arg1: memref<2x8x32xf32, #tpu.memory_space<vmem>>, %arg2: memref<2x1x8xf32, #tpu.memory_space<vmem>>, %arg3: memref<1x32xf32, #tpu.memory_space<vmem>>, %arg4: memref<1x32xf32, #tpu.memory_space<vmem>>, %arg5: memref<2x32x96xbf16, #tpu.memory_space<vmem>>, %arg6: memref<2x1x96xf32, #tpu.memory_space<vmem>>, %arg7: memref<2x32x32xbf16, #tpu.memory_space<vmem>>, %arg8: memref<2x1x32xf32, #tpu.memory_space<vmem>>, %arg9: memref<2x1x32xf32, #tpu.memory_space<vmem>>, %arg10: memref<2x1x32xf32, #tpu.memory_space<vmem>>, %arg11: memref<2x32x64xbf16, #tpu.memory_space<vmem>>, %arg12: memref<2x1x64xf32, #tpu.memory_space<vmem>>, %arg13: memref<2x64x32xbf16, #tpu.memory_space<vmem>>, %arg14: memref<2x1x32xf32, #tpu.memory_space<vmem>>, %arg15: memref<2x1x32xf32, #tpu.memory_space<vmem>>, %arg16: memref<2x1x32xf32, #tpu.memory_space<vmem>>, %arg17: memref<2x8x32xf32, #tpu.memory_space<vmem>>) attributes {dimension_semantics = [#tpu.dimension_semantics<arbitrary>], iteration_bounds = array<i64: 1>, scalar_prefetch = 0 : i64, scratch_operands = 0 : i64, tpu.core_type = #tpu.core_type<tc>, window_params = [{pipeline_mode = #tpu.pipeline_mode<synchronous>, transform_indices = @transform_0, window_bounds = array<i64: 2, 8, 32>}, {pipeline_mode = #tpu.pipeline_mode<synchronous>, transform_indices = @transform_1, window_bounds = array<i64: 2, 1, 8>}, {pipeline_mode = #tpu.pipeline_mode<synchronous>, transform_indices = @transform_2, window_bounds = array<i64: 1, 32>}, {pipeline_mode = #tpu.pipeline_mode<synchronous>, transform_indices = @transform_3, window_bounds = array<i64: 1, 32>}, {pipeline_mode = #tpu.pipeline_mode<synchronous>, transform_indices = @transform_4, window_bounds = array<i64: 2, 32, 96>}, {pipeline_mode = #tpu.pipeline_mode<synchronous>, transform_indices = @transform_5, window_bounds = array<i64: 2, 1, 96>}, {pipeline_mode = #tpu.pipeline_mode<synchronous>, transform_indices = @transform_6, window_bounds = array<i64: 2, 32, 32>}, {pipeline_mode = #tpu.pipeline_mode<synchronous>, transform_indices = @transform_7, window_bounds = array<i64: 2, 1, 32>}, {pipeline_mode = #tpu.pipeline_mode<synchronous>, transform_indices = @transform_8, window_bounds = array<i64: 2, 1, 32>}, {pipeline_mode = #tpu.pipeline_mode<synchronous>, transform_indices = @transform_9, window_bounds = array<i64: 2, 1, 32>}, {pipeline_mode = #tpu.pipeline_mode<synchronous>, transform_indices = @transform_10, window_bounds = array<i64: 2, 32, 64>}, {pipeline_mode = #tpu.pipeline_mode<synchronous>, transform_indices = @transform_11, window_bounds = array<i64: 2, 1, 64>}, {pipeline_mode = #tpu.pipeline_mode<synchronous>, transform_indices = @transform_12, window_bounds = array<i64: 2, 64, 32>}, {pipeline_mode = #tpu.pipeline_mode<synchronous>, transform_indices = @transform_13, window_bounds = array<i64: 2, 1, 32>}, {pipeline_mode = #tpu.pipeline_mode<synchronous>, transform_indices = @transform_14, window_bounds = array<i64: 2, 1, 32>}, {pipeline_mode = #tpu.pipeline_mode<synchronous>, transform_indices = @transform_15, window_bounds = array<i64: 2, 1, 32>}, {pipeline_mode = #tpu.pipeline_mode<synchronous>, transform_indices = @transform_16, window_bounds = array<i64: 2, 8, 32>}]} {
    %c0 = arith.constant 0 : index
    %c0_0 = arith.constant 0 : index
    %c0_1 = arith.constant 0 : index
    %0 = vector.load %arg1[%c0, %c0_0, %c0_1] : memref<2x8x32xf32, #tpu.memory_space<vmem>>, vector<2x8x32xf32>
    %1 = vector.shape_cast %0 : vector<2x8x32xf32> to vector<16x32xf32>
    %c0_2 = arith.constant 0 : index
    %c0_3 = arith.constant 0 : index
    %c0_4 = arith.constant 0 : index
    %2 = vector.load %arg2[%c0_2, %c0_3, %c0_4] : memref<2x1x8xf32, #tpu.memory_space<vmem>>, vector<2x1x8xf32>
    %3 = vector.shape_cast %2 : vector<2x1x8xf32> to vector<2x1x8xf32>
    %4 = vector.broadcast %3 : vector<2x1x8xf32> to vector<2x8x8xf32>
    %c0_5 = arith.constant 0 : index
    %c0_6 = arith.constant 0 : index
    %5 = vector.load %arg3[%c0_5, %c0_6] : memref<1x32xf32, #tpu.memory_space<vmem>>, vector<1x32xf32>
    %c0_7 = arith.constant 0 : index
    %c0_8 = arith.constant 0 : index
    %6 = vector.load %arg4[%c0_7, %c0_8] : memref<1x32xf32, #tpu.memory_space<vmem>>, vector<1x32xf32>
    %cst = arith.constant dense<0.000000e+00> : vector<16xf32>
    %7 = vector.multi_reduction <add>, %1, %cst [1] : vector<16x32xf32> to vector<16xf32>
    %8 = vector.shape_cast %7 : vector<16xf32> to vector<16x1xf32>
    %cst_9 = arith.constant 3.200000e+01 : f32
    %9 = vector.broadcast %cst_9 : f32 to vector<16x1xf32>
    %10 = arith.divf %8, %9 : vector<16x1xf32>
    %11 = vector.broadcast %10 : vector<16x1xf32> to vector<16x32xf32>
    %12 = arith.subf %1, %11 : vector<16x32xf32>
    %13 = arith.mulf %12, %12 : vector<16x32xf32>
    %cst_10 = arith.constant dense<0.000000e+00> : vector<16xf32>
    %14 = vector.multi_reduction <add>, %13, %cst_10 [1] : vector<16x32xf32> to vector<16xf32>
    %15 = vector.shape_cast %14 : vector<16xf32> to vector<16x1xf32>
    %cst_11 = arith.constant 3.200000e+01 : f32
    %16 = vector.broadcast %cst_11 : f32 to vector<16x1xf32>
    %17 = arith.divf %15, %16 : vector<16x1xf32>
    %18 = vector.broadcast %10 : vector<16x1xf32> to vector<16x32xf32>
    %19 = arith.subf %1, %18 : vector<16x32xf32>
    %cst_12 = arith.constant 9.99999974E-6 : f32
    %20 = vector.broadcast %cst_12 : f32 to vector<16x1xf32>
    %21 = arith.addf %17, %20 : vector<16x1xf32>
    %22 = math.rsqrt %21 : vector<16x1xf32>
    %23 = vector.broadcast %22 : vector<16x1xf32> to vector<16x32xf32>
    %24 = arith.mulf %19, %23 : vector<16x32xf32>
    %25 = vector.broadcast %5 : vector<1x32xf32> to vector<16x32xf32>
    %26 = arith.mulf %24, %25 : vector<16x32xf32>
    %27 = vector.broadcast %6 : vector<1x32xf32> to vector<16x32xf32>
    %28 = arith.addf %26, %27 : vector<16x32xf32>
    %c0_13 = arith.constant 0 : index
    %c0_14 = arith.constant 0 : index
    %c0_15 = arith.constant 0 : index
    %29 = vector.load %arg5[%c0_13, %c0_14, %c0_15] : memref<2x32x96xbf16, #tpu.memory_space<vmem>>, vector<1x32x96xbf16>
    %30 = vector.shape_cast %29 : vector<1x32x96xbf16> to vector<32x96xbf16>
    %c0_16 = arith.constant 0 : index
    %c0_17 = arith.constant 0 : index
    %c0_18 = arith.constant 0 : index
    %31 = vector.load %arg7[%c0_16, %c0_17, %c0_18] : memref<2x32x32xbf16, #tpu.memory_space<vmem>>, vector<1x32x32xbf16>
    %32 = vector.shape_cast %31 : vector<1x32x32xbf16> to vector<32x32xbf16>
    %33 = arith.truncf %28 : vector<16x32xf32> to vector<16x32xbf16>
    %cst_19 = arith.constant dense<0.000000e+00> : vector<16x96xf32>
    %34 = tpu.matmul %33, %30, %cst_19 {dimension_numbers = #tpu.dot_dimension_numbers<[1], [0], [0], [1], [0, 0, 1, 1], [], []>} : vector<16x32xbf16>, vector<32x96xbf16>, vector<16x96xf32> -> vector<16x96xf32>
    %c0_20 = arith.constant 0 : index
    %c0_21 = arith.constant 0 : index
    %c0_22 = arith.constant 0 : index
    %35 = vector.load %arg6[%c0_20, %c0_21, %c0_22] : memref<2x1x96xf32, #tpu.memory_space<vmem>>, vector<1x1x96xf32>
    %36 = vector.shape_cast %35 : vector<1x1x96xf32> to vector<1x96xf32>
    %37 = vector.broadcast %36 : vector<1x96xf32> to vector<16x96xf32>
    %38 = arith.addf %34, %37 : vector<16x96xf32>
    %cst_23 = arith.constant 0.000000e+00 : f32
    %39 = vector.broadcast %cst_23 : f32 to vector<16x32xf32>
    %40 = vector.extract_strided_slice %38 {offsets = [0, 0], sizes = [16, 16], strides = [1, 1]} : vector<16x96xf32> to vector<16x16xf32>
    %cst_24 = arith.constant 2.500000e-01 : f32
    %41 = vector.broadcast %cst_24 : f32 to vector<16x16xf32>
    %42 = arith.mulf %40, %41 : vector<16x16xf32>
    %43 = vector.shape_cast %42 : vector<16x16xf32> to vector<2x8x16xf32>
    %44 = vector.extract_strided_slice %38 {offsets = [0, 32], sizes = [16, 16], strides = [1, 1]} : vector<16x96xf32> to vector<16x16xf32>
    %45 = vector.shape_cast %44 : vector<16x16xf32> to vector<2x8x16xf32>
    %46 = vector.extract_strided_slice %38 {offsets = [0, 64], sizes = [16, 16], strides = [1, 1]} : vector<16x96xf32> to vector<16x16xf32>
    %47 = vector.shape_cast %46 : vector<16x16xf32> to vector<2x8x16xf32>
    %48 = arith.truncf %43 : vector<2x8x16xf32> to vector<2x8x16xbf16>
    %49 = arith.truncf %45 : vector<2x8x16xf32> to vector<2x8x16xbf16>
    "tpu.trace_start"() <{level = 10 : i32, message = "bqd,bkd->bqk"}> : () -> ()
    %cst_25 = arith.constant dense<0.000000e+00> : vector<2x8x8xf32>
    %50 = tpu.matmul %48, %49, %cst_25 {dimension_numbers = #tpu.dot_dimension_numbers<[2], [2], [1], [1], [0, 0, 0, 1, 1, 1], [0], [0]>} : vector<2x8x16xbf16>, vector<2x8x16xbf16>, vector<2x8x8xf32> -> vector<2x8x8xf32>
    "tpu.trace_stop"() : () -> ()
    %51 = arith.addf %50, %4 : vector<2x8x8xf32>
    %cst_26 = arith.constant dense<0xFF800000> : vector<2x8xf32>
    %52 = vector.multi_reduction <maximumf>, %51, %cst_26 [2] : vector<2x8x8xf32> to vector<2x8xf32>
    %53 = vector.shape_cast %52 : vector<2x8xf32> to vector<2x8x1xf32>
    %54 = vector.broadcast %53 : vector<2x8x1xf32> to vector<2x8x8xf32>
    %55 = arith.subf %51, %54 : vector<2x8x8xf32>
    %56 = math.exp %55 : vector<2x8x8xf32>
    %cst_27 = arith.constant dense<0.000000e+00> : vector<2x8xf32>
    %57 = vector.multi_reduction <add>, %56, %cst_27 [2] : vector<2x8x8xf32> to vector<2x8xf32>
    %58 = vector.shape_cast %57 : vector<2x8xf32> to vector<2x8x1xf32>
    %59 = tpu.reciprocal %58 {approx = true} : vector<2x8x1xf32> -> vector<2x8x1xf32>
    %60 = vector.broadcast %59 : vector<2x8x1xf32> to vector<2x8x8xf32>
    %61 = arith.mulf %56, %60 : vector<2x8x8xf32>
    %62 = arith.truncf %61 : vector<2x8x8xf32> to vector<2x8x8xbf16>
    %63 = arith.truncf %47 : vector<2x8x16xf32> to vector<2x8x16xbf16>
    "tpu.trace_start"() <{level = 10 : i32, message = "bqk,bkd->bqd"}> : () -> ()
    %cst_28 = arith.constant dense<0.000000e+00> : vector<2x8x16xf32>
    %64 = tpu.matmul %62, %63, %cst_28 {dimension_numbers = #tpu.dot_dimension_numbers<[2], [1], [1], [2], [0, 0, 0, 1, 1, 2], [0], [0]>} : vector<2x8x8xbf16>, vector<2x8x16xbf16>, vector<2x8x16xf32> -> vector<2x8x16xf32>
    "tpu.trace_stop"() : () -> ()
    %65 = vector.shape_cast %64 : vector<2x8x16xf32> to vector<16x16xf32>
    %66 = arith.truncf %65 : vector<16x16xf32> to vector<16x16xbf16>
    %67 = vector.extract_strided_slice %32 {offsets = [0, 0], sizes = [16, 32], strides = [1, 1]} : vector<32x32xbf16> to vector<16x32xbf16>
    %cst_29 = arith.constant dense<0.000000e+00> : vector<16x32xf32>
    %68 = tpu.matmul %66, %67, %cst_29 {dimension_numbers = #tpu.dot_dimension_numbers<[1], [0], [0], [1], [0, 0, 1, 1], [], []>} : vector<16x16xbf16>, vector<16x32xbf16>, vector<16x32xf32> -> vector<16x32xf32>
    %69 = arith.addf %39, %68 : vector<16x32xf32>
    %70 = vector.extract_strided_slice %38 {offsets = [0, 16], sizes = [16, 16], strides = [1, 1]} : vector<16x96xf32> to vector<16x16xf32>
    %cst_30 = arith.constant 2.500000e-01 : f32
    %71 = vector.broadcast %cst_30 : f32 to vector<16x16xf32>
    %72 = arith.mulf %70, %71 : vector<16x16xf32>
    %73 = vector.shape_cast %72 : vector<16x16xf32> to vector<2x8x16xf32>
    %74 = vector.extract_strided_slice %38 {offsets = [0, 48], sizes = [16, 16], strides = [1, 1]} : vector<16x96xf32> to vector<16x16xf32>
    %75 = vector.shape_cast %74 : vector<16x16xf32> to vector<2x8x16xf32>
    %76 = vector.extract_strided_slice %38 {offsets = [0, 80], sizes = [16, 16], strides = [1, 1]} : vector<16x96xf32> to vector<16x16xf32>
    %77 = vector.shape_cast %76 : vector<16x16xf32> to vector<2x8x16xf32>
    %78 = arith.truncf %73 : vector<2x8x16xf32> to vector<2x8x16xbf16>
    %79 = arith.truncf %75 : vector<2x8x16xf32> to vector<2x8x16xbf16>
    "tpu.trace_start"() <{level = 10 : i32, message = "bqd,bkd->bqk"}> : () -> ()
    %cst_31 = arith.constant dense<0.000000e+00> : vector<2x8x8xf32>
    %80 = tpu.matmul %78, %79, %cst_31 {dimension_numbers = #tpu.dot_dimension_numbers<[2], [2], [1], [1], [0, 0, 0, 1, 1, 1], [0], [0]>} : vector<2x8x16xbf16>, vector<2x8x16xbf16>, vector<2x8x8xf32> -> vector<2x8x8xf32>
    "tpu.trace_stop"() : () -> ()
    %81 = arith.addf %80, %4 : vector<2x8x8xf32>
    %cst_32 = arith.constant dense<0xFF800000> : vector<2x8xf32>
    %82 = vector.multi_reduction <maximumf>, %81, %cst_32 [2] : vector<2x8x8xf32> to vector<2x8xf32>
    %83 = vector.shape_cast %82 : vector<2x8xf32> to vector<2x8x1xf32>
    %84 = vector.broadcast %83 : vector<2x8x1xf32> to vector<2x8x8xf32>
    %85 = arith.subf %81, %84 : vector<2x8x8xf32>
    %86 = math.exp %85 : vector<2x8x8xf32>
    %cst_33 = arith.constant dense<0.000000e+00> : vector<2x8xf32>
    %87 = vector.multi_reduction <add>, %86, %cst_33 [2] : vector<2x8x8xf32> to vector<2x8xf32>
    %88 = vector.shape_cast %87 : vector<2x8xf32> to vector<2x8x1xf32>
    %89 = tpu.reciprocal %88 {approx = true} : vector<2x8x1xf32> -> vector<2x8x1xf32>
    %90 = vector.broadcast %89 : vector<2x8x1xf32> to vector<2x8x8xf32>
    %91 = arith.mulf %86, %90 : vector<2x8x8xf32>
    %92 = arith.truncf %91 : vector<2x8x8xf32> to vector<2x8x8xbf16>
    %93 = arith.truncf %77 : vector<2x8x16xf32> to vector<2x8x16xbf16>
    "tpu.trace_start"() <{level = 10 : i32, message = "bqk,bkd->bqd"}> : () -> ()
    %cst_34 = arith.constant dense<0.000000e+00> : vector<2x8x16xf32>
    %94 = tpu.matmul %92, %93, %cst_34 {dimension_numbers = #tpu.dot_dimension_numbers<[2], [1], [1], [2], [0, 0, 0, 1, 1, 2], [0], [0]>} : vector<2x8x8xbf16>, vector<2x8x16xbf16>, vector<2x8x16xf32> -> vector<2x8x16xf32>
    "tpu.trace_stop"() : () -> ()
    %95 = vector.shape_cast %94 : vector<2x8x16xf32> to vector<16x16xf32>
    %96 = arith.truncf %95 : vector<16x16xf32> to vector<16x16xbf16>
    %97 = vector.extract_strided_slice %32 {offsets = [16, 0], sizes = [16, 32], strides = [1, 1]} : vector<32x32xbf16> to vector<16x32xbf16>
    %cst_35 = arith.constant dense<0.000000e+00> : vector<16x32xf32>
    %98 = tpu.matmul %96, %97, %cst_35 {dimension_numbers = #tpu.dot_dimension_numbers<[1], [0], [0], [1], [0, 0, 1, 1], [], []>} : vector<16x16xbf16>, vector<16x32xbf16>, vector<16x32xf32> -> vector<16x32xf32>
    %99 = arith.addf %69, %98 : vector<16x32xf32>
    %c0_36 = arith.constant 0 : index
    %c0_37 = arith.constant 0 : index
    %c0_38 = arith.constant 0 : index
    %100 = vector.load %arg8[%c0_36, %c0_37, %c0_38] : memref<2x1x32xf32, #tpu.memory_space<vmem>>, vector<1x1x32xf32>
    %101 = vector.shape_cast %100 : vector<1x1x32xf32> to vector<1x32xf32>
    %102 = vector.broadcast %101 : vector<1x32xf32> to vector<16x32xf32>
    %103 = arith.addf %99, %102 : vector<16x32xf32>
    %104 = arith.addf %28, %103 : vector<16x32xf32>
    %c0_39 = arith.constant 0 : index
    %c0_40 = arith.constant 0 : index
    %c0_41 = arith.constant 0 : index
    %105 = vector.load %arg9[%c0_39, %c0_40, %c0_41] : memref<2x1x32xf32, #tpu.memory_space<vmem>>, vector<1x1x32xf32>
    %106 = vector.shape_cast %105 : vector<1x1x32xf32> to vector<1x32xf32>
    %c0_42 = arith.constant 0 : index
    %c0_43 = arith.constant 0 : index
    %c0_44 = arith.constant 0 : index
    %107 = vector.load %arg10[%c0_42, %c0_43, %c0_44] : memref<2x1x32xf32, #tpu.memory_space<vmem>>, vector<1x1x32xf32>
    %108 = vector.shape_cast %107 : vector<1x1x32xf32> to vector<1x32xf32>
    %cst_45 = arith.constant dense<0.000000e+00> : vector<16xf32>
    %109 = vector.multi_reduction <add>, %104, %cst_45 [1] : vector<16x32xf32> to vector<16xf32>
    %110 = vector.shape_cast %109 : vector<16xf32> to vector<16x1xf32>
    %cst_46 = arith.constant 3.200000e+01 : f32
    %111 = vector.broadcast %cst_46 : f32 to vector<16x1xf32>
    %112 = arith.divf %110, %111 : vector<16x1xf32>
    %113 = vector.broadcast %112 : vector<16x1xf32> to vector<16x32xf32>
    %114 = arith.subf %104, %113 : vector<16x32xf32>
    %115 = arith.mulf %114, %114 : vector<16x32xf32>
    %cst_47 = arith.constant dense<0.000000e+00> : vector<16xf32>
    %116 = vector.multi_reduction <add>, %115, %cst_47 [1] : vector<16x32xf32> to vector<16xf32>
    %117 = vector.shape_cast %116 : vector<16xf32> to vector<16x1xf32>
    %cst_48 = arith.constant 3.200000e+01 : f32
    %118 = vector.broadcast %cst_48 : f32 to vector<16x1xf32>
    %119 = arith.divf %117, %118 : vector<16x1xf32>
    %120 = vector.broadcast %112 : vector<16x1xf32> to vector<16x32xf32>
    %121 = arith.subf %104, %120 : vector<16x32xf32>
    %cst_49 = arith.constant 9.99999974E-6 : f32
    %122 = vector.broadcast %cst_49 : f32 to vector<16x1xf32>
    %123 = arith.addf %119, %122 : vector<16x1xf32>
    %124 = math.rsqrt %123 : vector<16x1xf32>
    %125 = vector.broadcast %124 : vector<16x1xf32> to vector<16x32xf32>
    %126 = arith.mulf %121, %125 : vector<16x32xf32>
    %127 = vector.broadcast %106 : vector<1x32xf32> to vector<16x32xf32>
    %128 = arith.mulf %126, %127 : vector<16x32xf32>
    %129 = vector.broadcast %108 : vector<1x32xf32> to vector<16x32xf32>
    %130 = arith.addf %128, %129 : vector<16x32xf32>
    %131 = arith.truncf %130 : vector<16x32xf32> to vector<16x32xbf16>
    %c0_50 = arith.constant 0 : index
    %c0_51 = arith.constant 0 : index
    %c0_52 = arith.constant 0 : index
    %132 = vector.load %arg11[%c0_50, %c0_51, %c0_52] : memref<2x32x64xbf16, #tpu.memory_space<vmem>>, vector<1x32x64xbf16>
    %133 = vector.shape_cast %132 : vector<1x32x64xbf16> to vector<32x64xbf16>
    %cst_53 = arith.constant dense<0.000000e+00> : vector<16x64xf32>
    %134 = tpu.matmul %131, %133, %cst_53 {dimension_numbers = #tpu.dot_dimension_numbers<[1], [0], [0], [1], [0, 0, 1, 1], [], []>} : vector<16x32xbf16>, vector<32x64xbf16>, vector<16x64xf32> -> vector<16x64xf32>
    %c0_54 = arith.constant 0 : index
    %c0_55 = arith.constant 0 : index
    %c0_56 = arith.constant 0 : index
    %135 = vector.load %arg12[%c0_54, %c0_55, %c0_56] : memref<2x1x64xf32, #tpu.memory_space<vmem>>, vector<1x1x64xf32>
    %136 = vector.shape_cast %135 : vector<1x1x64xf32> to vector<1x64xf32>
    %137 = vector.broadcast %136 : vector<1x64xf32> to vector<16x64xf32>
    %138 = arith.addf %134, %137 : vector<16x64xf32>
    %139 = arith.mulf %138, %138 : vector<16x64xf32>
    %140 = arith.mulf %138, %139 : vector<16x64xf32>
    %cst_57 = arith.constant 4.471500e-02 : f32
    %141 = vector.broadcast %cst_57 : f32 to vector<16x64xf32>
    %142 = arith.mulf %141, %140 : vector<16x64xf32>
    %143 = arith.addf %138, %142 : vector<16x64xf32>
    %cst_58 = arith.constant 0.797884583 : f32
    %144 = vector.broadcast %cst_58 : f32 to vector<16x64xf32>
    %145 = arith.mulf %144, %143 : vector<16x64xf32>
    %146 = math.tanh %145 : vector<16x64xf32>
    %cst_59 = arith.constant 1.000000e+00 : f32
    %147 = vector.broadcast %cst_59 : f32 to vector<16x64xf32>
    %148 = arith.addf %147, %146 : vector<16x64xf32>
    %cst_60 = arith.constant 5.000000e-01 : f32
    %149 = vector.broadcast %cst_60 : f32 to vector<16x64xf32>
    %150 = arith.mulf %149, %148 : vector<16x64xf32>
    %151 = arith.mulf %138, %150 : vector<16x64xf32>
    %152 = arith.truncf %151 : vector<16x64xf32> to vector<16x64xbf16>
    %c0_61 = arith.constant 0 : index
    %c0_62 = arith.constant 0 : index
    %c0_63 = arith.constant 0 : index
    %153 = vector.load %arg13[%c0_61, %c0_62, %c0_63] : memref<2x64x32xbf16, #tpu.memory_space<vmem>>, vector<1x64x32xbf16>
    %154 = vector.shape_cast %153 : vector<1x64x32xbf16> to vector<64x32xbf16>
    %cst_64 = arith.constant dense<0.000000e+00> : vector<16x32xf32>
    %155 = tpu.matmul %152, %154, %cst_64 {dimension_numbers = #tpu.dot_dimension_numbers<[1], [0], [0], [1], [0, 0, 1, 1], [], []>} : vector<16x64xbf16>, vector<64x32xbf16>, vector<16x32xf32> -> vector<16x32xf32>
    %c0_65 = arith.constant 0 : index
    %c0_66 = arith.constant 0 : index
    %c0_67 = arith.constant 0 : index
    %156 = vector.load %arg14[%c0_65, %c0_66, %c0_67] : memref<2x1x32xf32, #tpu.memory_space<vmem>>, vector<1x1x32xf32>
    %157 = vector.shape_cast %156 : vector<1x1x32xf32> to vector<1x32xf32>
    %158 = vector.broadcast %157 : vector<1x32xf32> to vector<16x32xf32>
    %159 = arith.addf %155, %158 : vector<16x32xf32>
    %160 = arith.addf %130, %159 : vector<16x32xf32>
    %c0_68 = arith.constant 0 : index
    %c0_69 = arith.constant 0 : index
    %c0_70 = arith.constant 0 : index
    %161 = vector.load %arg15[%c0_68, %c0_69, %c0_70] : memref<2x1x32xf32, #tpu.memory_space<vmem>>, vector<1x1x32xf32>
    %162 = vector.shape_cast %161 : vector<1x1x32xf32> to vector<1x32xf32>
    %c0_71 = arith.constant 0 : index
    %c0_72 = arith.constant 0 : index
    %c0_73 = arith.constant 0 : index
    %163 = vector.load %arg16[%c0_71, %c0_72, %c0_73] : memref<2x1x32xf32, #tpu.memory_space<vmem>>, vector<1x1x32xf32>
    %164 = vector.shape_cast %163 : vector<1x1x32xf32> to vector<1x32xf32>
    %cst_74 = arith.constant dense<0.000000e+00> : vector<16xf32>
    %165 = vector.multi_reduction <add>, %160, %cst_74 [1] : vector<16x32xf32> to vector<16xf32>
    %166 = vector.shape_cast %165 : vector<16xf32> to vector<16x1xf32>
    %cst_75 = arith.constant 3.200000e+01 : f32
    %167 = vector.broadcast %cst_75 : f32 to vector<16x1xf32>
    %168 = arith.divf %166, %167 : vector<16x1xf32>
    %169 = vector.broadcast %168 : vector<16x1xf32> to vector<16x32xf32>
    %170 = arith.subf %160, %169 : vector<16x32xf32>
    %171 = arith.mulf %170, %170 : vector<16x32xf32>
    %cst_76 = arith.constant dense<0.000000e+00> : vector<16xf32>
    %172 = vector.multi_reduction <add>, %171, %cst_76 [1] : vector<16x32xf32> to vector<16xf32>
    %173 = vector.shape_cast %172 : vector<16xf32> to vector<16x1xf32>
    %cst_77 = arith.constant 3.200000e+01 : f32
    %174 = vector.broadcast %cst_77 : f32 to vector<16x1xf32>
    %175 = arith.divf %173, %174 : vector<16x1xf32>
    %176 = vector.broadcast %168 : vector<16x1xf32> to vector<16x32xf32>
    %177 = arith.subf %160, %176 : vector<16x32xf32>
    %cst_78 = arith.constant 9.99999974E-6 : f32
    %178 = vector.broadcast %cst_78 : f32 to vector<16x1xf32>
    %179 = arith.addf %175, %178 : vector<16x1xf32>
    %180 = math.rsqrt %179 : vector<16x1xf32>
    %181 = vector.broadcast %180 : vector<16x1xf32> to vector<16x32xf32>
    %182 = arith.mulf %177, %181 : vector<16x32xf32>
    %183 = vector.broadcast %162 : vector<1x32xf32> to vector<16x32xf32>
    %184 = arith.mulf %182, %183 : vector<16x32xf32>
    %185 = vector.broadcast %164 : vector<1x32xf32> to vector<16x32xf32>
    %186 = arith.addf %184, %185 : vector<16x32xf32>
    %c1 = arith.constant 1 : index
    %c0_79 = arith.constant 0 : index
    %c0_80 = arith.constant 0 : index
    %187 = vector.load %arg5[%c1, %c0_79, %c0_80] : memref<2x32x96xbf16, #tpu.memory_space<vmem>>, vector<1x32x96xbf16>
    %188 = vector.shape_cast %187 : vector<1x32x96xbf16> to vector<32x96xbf16>
    %c1_81 = arith.constant 1 : index
    %c0_82 = arith.constant 0 : index
    %c0_83 = arith.constant 0 : index
    %189 = vector.load %arg7[%c1_81, %c0_82, %c0_83] : memref<2x32x32xbf16, #tpu.memory_space<vmem>>, vector<1x32x32xbf16>
    %190 = vector.shape_cast %189 : vector<1x32x32xbf16> to vector<32x32xbf16>
    %191 = arith.truncf %186 : vector<16x32xf32> to vector<16x32xbf16>
    %cst_84 = arith.constant dense<0.000000e+00> : vector<16x96xf32>
    %192 = tpu.matmul %191, %188, %cst_84 {dimension_numbers = #tpu.dot_dimension_numbers<[1], [0], [0], [1], [0, 0, 1, 1], [], []>} : vector<16x32xbf16>, vector<32x96xbf16>, vector<16x96xf32> -> vector<16x96xf32>
    %c1_85 = arith.constant 1 : index
    %c0_86 = arith.constant 0 : index
    %c0_87 = arith.constant 0 : index
    %193 = vector.load %arg6[%c1_85, %c0_86, %c0_87] : memref<2x1x96xf32, #tpu.memory_space<vmem>>, vector<1x1x96xf32>
    %194 = vector.shape_cast %193 : vector<1x1x96xf32> to vector<1x96xf32>
    %195 = vector.broadcast %194 : vector<1x96xf32> to vector<16x96xf32>
    %196 = arith.addf %192, %195 : vector<16x96xf32>
    %cst_88 = arith.constant 0.000000e+00 : f32
    %197 = vector.broadcast %cst_88 : f32 to vector<16x32xf32>
    %198 = vector.extract_strided_slice %196 {offsets = [0, 0], sizes = [16, 16], strides = [1, 1]} : vector<16x96xf32> to vector<16x16xf32>
    %cst_89 = arith.constant 2.500000e-01 : f32
    %199 = vector.broadcast %cst_89 : f32 to vector<16x16xf32>
    %200 = arith.mulf %198, %199 : vector<16x16xf32>
    %201 = vector.shape_cast %200 : vector<16x16xf32> to vector<2x8x16xf32>
    %202 = vector.extract_strided_slice %196 {offsets = [0, 32], sizes = [16, 16], strides = [1, 1]} : vector<16x96xf32> to vector<16x16xf32>
    %203 = vector.shape_cast %202 : vector<16x16xf32> to vector<2x8x16xf32>
    %204 = vector.extract_strided_slice %196 {offsets = [0, 64], sizes = [16, 16], strides = [1, 1]} : vector<16x96xf32> to vector<16x16xf32>
    %205 = vector.shape_cast %204 : vector<16x16xf32> to vector<2x8x16xf32>
    %206 = arith.truncf %201 : vector<2x8x16xf32> to vector<2x8x16xbf16>
    %207 = arith.truncf %203 : vector<2x8x16xf32> to vector<2x8x16xbf16>
    "tpu.trace_start"() <{level = 10 : i32, message = "bqd,bkd->bqk"}> : () -> ()
    %cst_90 = arith.constant dense<0.000000e+00> : vector<2x8x8xf32>
    %208 = tpu.matmul %206, %207, %cst_90 {dimension_numbers = #tpu.dot_dimension_numbers<[2], [2], [1], [1], [0, 0, 0, 1, 1, 1], [0], [0]>} : vector<2x8x16xbf16>, vector<2x8x16xbf16>, vector<2x8x8xf32> -> vector<2x8x8xf32>
    "tpu.trace_stop"() : () -> ()
    %209 = arith.addf %208, %4 : vector<2x8x8xf32>
    %cst_91 = arith.constant dense<0xFF800000> : vector<2x8xf32>
    %210 = vector.multi_reduction <maximumf>, %209, %cst_91 [2] : vector<2x8x8xf32> to vector<2x8xf32>
    %211 = vector.shape_cast %210 : vector<2x8xf32> to vector<2x8x1xf32>
    %212 = vector.broadcast %211 : vector<2x8x1xf32> to vector<2x8x8xf32>
    %213 = arith.subf %209, %212 : vector<2x8x8xf32>
    %214 = math.exp %213 : vector<2x8x8xf32>
    %cst_92 = arith.constant dense<0.000000e+00> : vector<2x8xf32>
    %215 = vector.multi_reduction <add>, %214, %cst_92 [2] : vector<2x8x8xf32> to vector<2x8xf32>
    %216 = vector.shape_cast %215 : vector<2x8xf32> to vector<2x8x1xf32>
    %217 = tpu.reciprocal %216 {approx = true} : vector<2x8x1xf32> -> vector<2x8x1xf32>
    %218 = vector.broadcast %217 : vector<2x8x1xf32> to vector<2x8x8xf32>
    %219 = arith.mulf %214, %218 : vector<2x8x8xf32>
    %220 = arith.truncf %219 : vector<2x8x8xf32> to vector<2x8x8xbf16>
    %221 = arith.truncf %205 : vector<2x8x16xf32> to vector<2x8x16xbf16>
    "tpu.trace_start"() <{level = 10 : i32, message = "bqk,bkd->bqd"}> : () -> ()
    %cst_93 = arith.constant dense<0.000000e+00> : vector<2x8x16xf32>
    %222 = tpu.matmul %220, %221, %cst_93 {dimension_numbers = #tpu.dot_dimension_numbers<[2], [1], [1], [2], [0, 0, 0, 1, 1, 2], [0], [0]>} : vector<2x8x8xbf16>, vector<2x8x16xbf16>, vector<2x8x16xf32> -> vector<2x8x16xf32>
    "tpu.trace_stop"() : () -> ()
    %223 = vector.shape_cast %222 : vector<2x8x16xf32> to vector<16x16xf32>
    %224 = arith.truncf %223 : vector<16x16xf32> to vector<16x16xbf16>
    %225 = vector.extract_strided_slice %190 {offsets = [0, 0], sizes = [16, 32], strides = [1, 1]} : vector<32x32xbf16> to vector<16x32xbf16>
    %cst_94 = arith.constant dense<0.000000e+00> : vector<16x32xf32>
    %226 = tpu.matmul %224, %225, %cst_94 {dimension_numbers = #tpu.dot_dimension_numbers<[1], [0], [0], [1], [0, 0, 1, 1], [], []>} : vector<16x16xbf16>, vector<16x32xbf16>, vector<16x32xf32> -> vector<16x32xf32>
    %227 = arith.addf %197, %226 : vector<16x32xf32>
    %228 = vector.extract_strided_slice %196 {offsets = [0, 16], sizes = [16, 16], strides = [1, 1]} : vector<16x96xf32> to vector<16x16xf32>
    %cst_95 = arith.constant 2.500000e-01 : f32
    %229 = vector.broadcast %cst_95 : f32 to vector<16x16xf32>
    %230 = arith.mulf %228, %229 : vector<16x16xf32>
    %231 = vector.shape_cast %230 : vector<16x16xf32> to vector<2x8x16xf32>
    %232 = vector.extract_strided_slice %196 {offsets = [0, 48], sizes = [16, 16], strides = [1, 1]} : vector<16x96xf32> to vector<16x16xf32>
    %233 = vector.shape_cast %232 : vector<16x16xf32> to vector<2x8x16xf32>
    %234 = vector.extract_strided_slice %196 {offsets = [0, 80], sizes = [16, 16], strides = [1, 1]} : vector<16x96xf32> to vector<16x16xf32>
    %235 = vector.shape_cast %234 : vector<16x16xf32> to vector<2x8x16xf32>
    %236 = arith.truncf %231 : vector<2x8x16xf32> to vector<2x8x16xbf16>
    %237 = arith.truncf %233 : vector<2x8x16xf32> to vector<2x8x16xbf16>
    "tpu.trace_start"() <{level = 10 : i32, message = "bqd,bkd->bqk"}> : () -> ()
    %cst_96 = arith.constant dense<0.000000e+00> : vector<2x8x8xf32>
    %238 = tpu.matmul %236, %237, %cst_96 {dimension_numbers = #tpu.dot_dimension_numbers<[2], [2], [1], [1], [0, 0, 0, 1, 1, 1], [0], [0]>} : vector<2x8x16xbf16>, vector<2x8x16xbf16>, vector<2x8x8xf32> -> vector<2x8x8xf32>
    "tpu.trace_stop"() : () -> ()
    %239 = arith.addf %238, %4 : vector<2x8x8xf32>
    %cst_97 = arith.constant dense<0xFF800000> : vector<2x8xf32>
    %240 = vector.multi_reduction <maximumf>, %239, %cst_97 [2] : vector<2x8x8xf32> to vector<2x8xf32>
    %241 = vector.shape_cast %240 : vector<2x8xf32> to vector<2x8x1xf32>
    %242 = vector.broadcast %241 : vector<2x8x1xf32> to vector<2x8x8xf32>
    %243 = arith.subf %239, %242 : vector<2x8x8xf32>
    %244 = math.exp %243 : vector<2x8x8xf32>
    %cst_98 = arith.constant dense<0.000000e+00> : vector<2x8xf32>
    %245 = vector.multi_reduction <add>, %244, %cst_98 [2] : vector<2x8x8xf32> to vector<2x8xf32>
    %246 = vector.shape_cast %245 : vector<2x8xf32> to vector<2x8x1xf32>
    %247 = tpu.reciprocal %246 {approx = true} : vector<2x8x1xf32> -> vector<2x8x1xf32>
    %248 = vector.broadcast %247 : vector<2x8x1xf32> to vector<2x8x8xf32>
    %249 = arith.mulf %244, %248 : vector<2x8x8xf32>
    %250 = arith.truncf %249 : vector<2x8x8xf32> to vector<2x8x8xbf16>
    %251 = arith.truncf %235 : vector<2x8x16xf32> to vector<2x8x16xbf16>
    "tpu.trace_start"() <{level = 10 : i32, message = "bqk,bkd->bqd"}> : () -> ()
    %cst_99 = arith.constant dense<0.000000e+00> : vector<2x8x16xf32>
    %252 = tpu.matmul %250, %251, %cst_99 {dimension_numbers = #tpu.dot_dimension_numbers<[2], [1], [1], [2], [0, 0, 0, 1, 1, 2], [0], [0]>} : vector<2x8x8xbf16>, vector<2x8x16xbf16>, vector<2x8x16xf32> -> vector<2x8x16xf32>
    "tpu.trace_stop"() : () -> ()
    %253 = vector.shape_cast %252 : vector<2x8x16xf32> to vector<16x16xf32>
    %254 = arith.truncf %253 : vector<16x16xf32> to vector<16x16xbf16>
    %255 = vector.extract_strided_slice %190 {offsets = [16, 0], sizes = [16, 32], strides = [1, 1]} : vector<32x32xbf16> to vector<16x32xbf16>
    %cst_100 = arith.constant dense<0.000000e+00> : vector<16x32xf32>
    %256 = tpu.matmul %254, %255, %cst_100 {dimension_numbers = #tpu.dot_dimension_numbers<[1], [0], [0], [1], [0, 0, 1, 1], [], []>} : vector<16x16xbf16>, vector<16x32xbf16>, vector<16x32xf32> -> vector<16x32xf32>
    %257 = arith.addf %227, %256 : vector<16x32xf32>
    %c1_101 = arith.constant 1 : index
    %c0_102 = arith.constant 0 : index
    %c0_103 = arith.constant 0 : index
    %258 = vector.load %arg8[%c1_101, %c0_102, %c0_103] : memref<2x1x32xf32, #tpu.memory_space<vmem>>, vector<1x1x32xf32>
    %259 = vector.shape_cast %258 : vector<1x1x32xf32> to vector<1x32xf32>
    %260 = vector.broadcast %259 : vector<1x32xf32> to vector<16x32xf32>
    %261 = arith.addf %257, %260 : vector<16x32xf32>
    %262 = arith.addf %186, %261 : vector<16x32xf32>
    %c1_104 = arith.constant 1 : index
    %c0_105 = arith.constant 0 : index
    %c0_106 = arith.constant 0 : index
    %263 = vector.load %arg9[%c1_104, %c0_105, %c0_106] : memref<2x1x32xf32, #tpu.memory_space<vmem>>, vector<1x1x32xf32>
    %264 = vector.shape_cast %263 : vector<1x1x32xf32> to vector<1x32xf32>
    %c1_107 = arith.constant 1 : index
    %c0_108 = arith.constant 0 : index
    %c0_109 = arith.constant 0 : index
    %265 = vector.load %arg10[%c1_107, %c0_108, %c0_109] : memref<2x1x32xf32, #tpu.memory_space<vmem>>, vector<1x1x32xf32>
    %266 = vector.shape_cast %265 : vector<1x1x32xf32> to vector<1x32xf32>
    %cst_110 = arith.constant dense<0.000000e+00> : vector<16xf32>
    %267 = vector.multi_reduction <add>, %262, %cst_110 [1] : vector<16x32xf32> to vector<16xf32>
    %268 = vector.shape_cast %267 : vector<16xf32> to vector<16x1xf32>
    %cst_111 = arith.constant 3.200000e+01 : f32
    %269 = vector.broadcast %cst_111 : f32 to vector<16x1xf32>
    %270 = arith.divf %268, %269 : vector<16x1xf32>
    %271 = vector.broadcast %270 : vector<16x1xf32> to vector<16x32xf32>
    %272 = arith.subf %262, %271 : vector<16x32xf32>
    %273 = arith.mulf %272, %272 : vector<16x32xf32>
    %cst_112 = arith.constant dense<0.000000e+00> : vector<16xf32>
    %274 = vector.multi_reduction <add>, %273, %cst_112 [1] : vector<16x32xf32> to vector<16xf32>
    %275 = vector.shape_cast %274 : vector<16xf32> to vector<16x1xf32>
    %cst_113 = arith.constant 3.200000e+01 : f32
    %276 = vector.broadcast %cst_113 : f32 to vector<16x1xf32>
    %277 = arith.divf %275, %276 : vector<16x1xf32>
    %278 = vector.broadcast %270 : vector<16x1xf32> to vector<16x32xf32>
    %279 = arith.subf %262, %278 : vector<16x32xf32>
    %cst_114 = arith.constant 9.99999974E-6 : f32
    %280 = vector.broadcast %cst_114 : f32 to vector<16x1xf32>
    %281 = arith.addf %277, %280 : vector<16x1xf32>
    %282 = math.rsqrt %281 : vector<16x1xf32>
    %283 = vector.broadcast %282 : vector<16x1xf32> to vector<16x32xf32>
    %284 = arith.mulf %279, %283 : vector<16x32xf32>
    %285 = vector.broadcast %264 : vector<1x32xf32> to vector<16x32xf32>
    %286 = arith.mulf %284, %285 : vector<16x32xf32>
    %287 = vector.broadcast %266 : vector<1x32xf32> to vector<16x32xf32>
    %288 = arith.addf %286, %287 : vector<16x32xf32>
    %289 = arith.truncf %288 : vector<16x32xf32> to vector<16x32xbf16>
    %c1_115 = arith.constant 1 : index
    %c0_116 = arith.constant 0 : index
    %c0_117 = arith.constant 0 : index
    %290 = vector.load %arg11[%c1_115, %c0_116, %c0_117] : memref<2x32x64xbf16, #tpu.memory_space<vmem>>, vector<1x32x64xbf16>
    %291 = vector.shape_cast %290 : vector<1x32x64xbf16> to vector<32x64xbf16>
    %cst_118 = arith.constant dense<0.000000e+00> : vector<16x64xf32>
    %292 = tpu.matmul %289, %291, %cst_118 {dimension_numbers = #tpu.dot_dimension_numbers<[1], [0], [0], [1], [0, 0, 1, 1], [], []>} : vector<16x32xbf16>, vector<32x64xbf16>, vector<16x64xf32> -> vector<16x64xf32>
    %c1_119 = arith.constant 1 : index
    %c0_120 = arith.constant 0 : index
    %c0_121 = arith.constant 0 : index
    %293 = vector.load %arg12[%c1_119, %c0_120, %c0_121] : memref<2x1x64xf32, #tpu.memory_space<vmem>>, vector<1x1x64xf32>
    %294 = vector.shape_cast %293 : vector<1x1x64xf32> to vector<1x64xf32>
    %295 = vector.broadcast %294 : vector<1x64xf32> to vector<16x64xf32>
    %296 = arith.addf %292, %295 : vector<16x64xf32>
    %297 = arith.mulf %296, %296 : vector<16x64xf32>
    %298 = arith.mulf %296, %297 : vector<16x64xf32>
    %cst_122 = arith.constant 4.471500e-02 : f32
    %299 = vector.broadcast %cst_122 : f32 to vector<16x64xf32>
    %300 = arith.mulf %299, %298 : vector<16x64xf32>
    %301 = arith.addf %296, %300 : vector<16x64xf32>
    %cst_123 = arith.constant 0.797884583 : f32
    %302 = vector.broadcast %cst_123 : f32 to vector<16x64xf32>
    %303 = arith.mulf %302, %301 : vector<16x64xf32>
    %304 = math.tanh %303 : vector<16x64xf32>
    %cst_124 = arith.constant 1.000000e+00 : f32
    %305 = vector.broadcast %cst_124 : f32 to vector<16x64xf32>
    %306 = arith.addf %305, %304 : vector<16x64xf32>
    %cst_125 = arith.constant 5.000000e-01 : f32
    %307 = vector.broadcast %cst_125 : f32 to vector<16x64xf32>
    %308 = arith.mulf %307, %306 : vector<16x64xf32>
    %309 = arith.mulf %296, %308 : vector<16x64xf32>
    %310 = arith.truncf %309 : vector<16x64xf32> to vector<16x64xbf16>
    %c1_126 = arith.constant 1 : index
    %c0_127 = arith.constant 0 : index
    %c0_128 = arith.constant 0 : index
    %311 = vector.load %arg13[%c1_126, %c0_127, %c0_128] : memref<2x64x32xbf16, #tpu.memory_space<vmem>>, vector<1x64x32xbf16>
    %312 = vector.shape_cast %311 : vector<1x64x32xbf16> to vector<64x32xbf16>
    %cst_129 = arith.constant dense<0.000000e+00> : vector<16x32xf32>
    %313 = tpu.matmul %310, %312, %cst_129 {dimension_numbers = #tpu.dot_dimension_numbers<[1], [0], [0], [1], [0, 0, 1, 1], [], []>} : vector<16x64xbf16>, vector<64x32xbf16>, vector<16x32xf32> -> vector<16x32xf32>
    %c1_130 = arith.constant 1 : index
    %c0_131 = arith.constant 0 : index
    %c0_132 = arith.constant 0 : index
    %314 = vector.load %arg14[%c1_130, %c0_131, %c0_132] : memref<2x1x32xf32, #tpu.memory_space<vmem>>, vector<1x1x32xf32>
    %315 = vector.shape_cast %314 : vector<1x1x32xf32> to vector<1x32xf32>
    %316 = vector.broadcast %315 : vector<1x32xf32> to vector<16x32xf32>
    %317 = arith.addf %313, %316 : vector<16x32xf32>
    %318 = arith.addf %288, %317 : vector<16x32xf32>
    %c1_133 = arith.constant 1 : index
    %c0_134 = arith.constant 0 : index
    %c0_135 = arith.constant 0 : index
    %319 = vector.load %arg15[%c1_133, %c0_134, %c0_135] : memref<2x1x32xf32, #tpu.memory_space<vmem>>, vector<1x1x32xf32>
    %320 = vector.shape_cast %319 : vector<1x1x32xf32> to vector<1x32xf32>
    %c1_136 = arith.constant 1 : index
    %c0_137 = arith.constant 0 : index
    %c0_138 = arith.constant 0 : index
    %321 = vector.load %arg16[%c1_136, %c0_137, %c0_138] : memref<2x1x32xf32, #tpu.memory_space<vmem>>, vector<1x1x32xf32>
    %322 = vector.shape_cast %321 : vector<1x1x32xf32> to vector<1x32xf32>
    %cst_139 = arith.constant dense<0.000000e+00> : vector<16xf32>
    %323 = vector.multi_reduction <add>, %318, %cst_139 [1] : vector<16x32xf32> to vector<16xf32>
    %324 = vector.shape_cast %323 : vector<16xf32> to vector<16x1xf32>
    %cst_140 = arith.constant 3.200000e+01 : f32
    %325 = vector.broadcast %cst_140 : f32 to vector<16x1xf32>
    %326 = arith.divf %324, %325 : vector<16x1xf32>
    %327 = vector.broadcast %326 : vector<16x1xf32> to vector<16x32xf32>
    %328 = arith.subf %318, %327 : vector<16x32xf32>
    %329 = arith.mulf %328, %328 : vector<16x32xf32>
    %cst_141 = arith.constant dense<0.000000e+00> : vector<16xf32>
    %330 = vector.multi_reduction <add>, %329, %cst_141 [1] : vector<16x32xf32> to vector<16xf32>
    %331 = vector.shape_cast %330 : vector<16xf32> to vector<16x1xf32>
    %cst_142 = arith.constant 3.200000e+01 : f32
    %332 = vector.broadcast %cst_142 : f32 to vector<16x1xf32>
    %333 = arith.divf %331, %332 : vector<16x1xf32>
    %334 = vector.broadcast %326 : vector<16x1xf32> to vector<16x32xf32>
    %335 = arith.subf %318, %334 : vector<16x32xf32>
    %cst_143 = arith.constant 9.99999974E-6 : f32
    %336 = vector.broadcast %cst_143 : f32 to vector<16x1xf32>
    %337 = arith.addf %333, %336 : vector<16x1xf32>
    %338 = math.rsqrt %337 : vector<16x1xf32>
    %339 = vector.broadcast %338 : vector<16x1xf32> to vector<16x32xf32>
    %340 = arith.mulf %335, %339 : vector<16x32xf32>
    %341 = vector.broadcast %320 : vector<1x32xf32> to vector<16x32xf32>
    %342 = arith.mulf %340, %341 : vector<16x32xf32>
    %343 = vector.broadcast %322 : vector<1x32xf32> to vector<16x32xf32>
    %344 = arith.addf %342, %343 : vector<16x32xf32>
    %345 = arith.negf %344 : vector<16x32xf32>
    %346 = math.exp %345 : vector<16x32xf32>
    %cst_144 = arith.constant 1.000000e+00 : f32
    %347 = vector.broadcast %cst_144 : f32 to vector<16x32xf32>
    %348 = arith.addf %347, %346 : vector<16x32xf32>
    %349 = arith.divf %347, %348 : vector<16x32xf32>
    %350 = vector.shape_cast %349 : vector<16x32xf32> to vector<2x8x32xf32>
    %c0_145 = arith.constant 0 : index
    %c0_146 = arith.constant 0 : index
    %c0_147 = arith.constant 0 : index
    %351 = vector.load %arg17[%c0_145, %c0_146, %c0_147] : memref<2x8x32xf32, #tpu.memory_space<vmem>>, vector<2x8x32xf32>
    tpu.vector_store %arg17[%c0_145, %c0_146, %c0_147], %350 {strides = array<i32>} : memref<2x8x32xf32, #tpu.memory_space<vmem>>, vector<2x8x32xf32>,
    return
  }
  func.func @transform_0(%arg0: i32) -> (i32, i32, i32) {
    %c0_i32 = arith.constant 0 : i32
    %c0_i32_0 = arith.constant 0 : i32
    %c0_i32_1 = arith.constant 0 : i32
    %c0_i32_2 = arith.constant 0 : i32
    return %c0_i32, %c0_i32_0, %c0_i32_1 : i32, i32, i32
  }
  func.func @transform_1(%arg0: i32) -> (i32, i32, i32) {
    %c0_i32 = arith.constant 0 : i32
    %c0_i32_0 = arith.constant 0 : i32
    %c0_i32_1 = arith.constant 0 : i32
    %c0_i32_2 = arith.constant 0 : i32
    return %c0_i32, %c0_i32_0, %c0_i32_1 : i32, i32, i32
  }
  func.func @transform_2(%arg0: i32) -> (i32, i32) {
    %c0_i32 = arith.constant 0 : i32
    %c0_i32_0 = arith.constant 0 : i32
    %c0_i32_1 = arith.constant 0 : i32
    return %c0_i32, %c0_i32_0 : i32, i32
  }
  func.func @transform_3(%arg0: i32) -> (i32, i32) {
    %c0_i32 = arith.constant 0 : i32
    %c0_i32_0 = arith.constant 0 : i32
    %c0_i32_1 = arith.constant 0 : i32
    return %c0_i32, %c0_i32_0 : i32, i32
  }
  func.func @transform_4(%arg0: i32) -> (i32, i32, i32) {
    %c0_i32 = arith.constant 0 : i32
    %c0_i32_0 = arith.constant 0 : i32
    %c0_i32_1 = arith.constant 0 : i32
    %c0_i32_2 = arith.constant 0 : i32
    return %c0_i32, %c0_i32_0, %c0_i32_1 : i32, i32, i32
  }
  func.func @transform_5(%arg0: i32) -> (i32, i32, i32) {
    %c0_i32 = arith.constant 0 : i32
    %c0_i32_0 = arith.constant 0 : i32
    %c0_i32_1 = arith.constant 0 : i32
    %c0_i32_2 = arith.constant 0 : i32
    return %c0_i32, %c0_i32_0, %c0_i32_1 : i32, i32, i32
  }
  func.func @transform_6(%arg0: i32) -> (i32, i32, i32) {
    %c0_i32 = arith.constant 0 : i32
    %c0_i32_0 = arith.constant 0 : i32
    %c0_i32_1 = arith.constant 0 : i32
    %c0_i32_2 = arith.constant 0 : i32
    return %c0_i32, %c0_i32_0, %c0_i32_1 : i32, i32, i32
  }
  func.func @transform_7(%arg0: i32) -> (i32, i32, i32) {
    %c0_i32 = arith.constant 0 : i32
    %c0_i32_0 = arith.constant 0 : i32
    %c0_i32_1 = arith.constant 0 : i32
    %c0_i32_2 = arith.constant 0 : i32
    return %c0_i32, %c0_i32_0, %c0_i32_1 : i32, i32, i32
  }
  func.func @transform_8(%arg0: i32) -> (i32, i32, i32) {
    %c0_i32 = arith.constant 0 : i32
    %c0_i32_0 = arith.constant 0 : i32
    %c0_i32_1 = arith.constant 0 : i32
    %c0_i32_2 = arith.constant 0 : i32
    return %c0_i32, %c0_i32_0, %c0_i32_1 : i32, i32, i32
  }
  func.func @transform_9(%arg0: i32) -> (i32, i32, i32) {
    %c0_i32 = arith.constant 0 : i32
    %c0_i32_0 = arith.constant 0 : i32
    %c0_i32_1 = arith.constant 0 : i32
    %c0_i32_2 = arith.constant 0 : i32
    return %c0_i32, %c0_i32_0, %c0_i32_1 : i32, i32, i32
  }
  func.func @transform_10(%arg0: i32) -> (i32, i32, i32) {
    %c0_i32 = arith.constant 0 : i32
    %c0_i32_0 = arith.constant 0 : i32
    %c0_i32_1 = arith.constant 0 : i32
    %c0_i32_2 = arith.constant 0 : i32
    return %c0_i32, %c0_i32_0, %c0_i32_1 : i32, i32, i32
  }
  func.func @transform_11(%arg0: i32) -> (i32, i32, i32) {
    %c0_i32 = arith.constant 0 : i32
    %c0_i32_0 = arith.constant 0 : i32
    %c0_i32_1 = arith.constant 0 : i32
    %c0_i32_2 = arith.constant 0 : i32
    return %c0_i32, %c0_i32_0, %c0_i32_1 : i32, i32, i32
  }
  func.func @transform_12(%arg0: i32) -> (i32, i32, i32) {
    %c0_i32 = arith.constant 0 : i32
    %c0_i32_0 = arith.constant 0 : i32
    %c0_i32_1 = arith.constant 0 : i32
    %c0_i32_2 = arith.constant 0 : i32
    return %c0_i32, %c0_i32_0, %c0_i32_1 : i32, i32, i32
  }
  func.func @transform_13(%arg0: i32) -> (i32, i32, i32) {
    %c0_i32 = arith.constant 0 : i32
    %c0_i32_0 = arith.constant 0 : i32
    %c0_i32_1 = arith.constant 0 : i32
    %c0_i32_2 = arith.constant 0 : i32
    return %c0_i32, %c0_i32_0, %c0_i32_1 : i32, i32, i32
  }
  func.func @transform_14(%arg0: i32) -> (i32, i32, i32) {
    %c0_i32 = arith.constant 0 : i32
    %c0_i32_0 = arith.constant 0 : i32
    %c0_i32_1 = arith.constant 0 : i32
    %c0_i32_2 = arith.constant 0 : i32
    return %c0_i32, %c0_i32_0, %c0_i32_1 : i32, i32, i32
  }
  func.func @transform_15(%arg0: i32) -> (i32, i32, i32) {
    %c0_i32 = arith.constant 0 : i32
    %c0_i32_0 = arith.constant 0 : i32
    %c0_i32_1 = arith.constant 0 : i32
    %c0_i32_2 = arith.constant 0 : i32
    return %c0_i32, %c0_i32_0, %c0_i32_1 : i32, i32, i32
  }
  func.func @transform_16(%arg0: i32) -> (i32, i32, i32) {
    %c0_i32 = arith.constant 0 : i32
    %c0_i32_0 = arith.constant 0 : i32
    %c0_i32_1 = arith.constant 0 : i32
    %c0_i32_2 = arith.constant 0 : i32
    return %c0_i32, %c0_i32_0, %c0_i32_1 : i32, i32, i32
  }
}

</mosaic_0001>

<llo_original>
// kernel: model_forward.1
$region0: #{model_forward.1}
  #allocation0 [shape = 'u32[]', space=smem, size = 0x4, offset = 0x4, fixed_abs, tag = 'smem constant byte address 0x4 - core index']
  #allocation1 [shape = 'u32[72,128]{1,0:T(1,128)}', space=vmem, size = 0x9000, scoped, tag = 'internal scratch']
  %s0 = inlined_call_operand.vmem [shape: f32[2,8,32], index: 0, kind: input, shape index: {}]
  %s1 = inlined_call_operand.vmem [shape: f32[2,1,8], index: 1, kind: input, shape index: {}]
  %s2 = inlined_call_operand.vmem [shape: f32[1,32], index: 2, kind: input, shape index: {}]
  %s3 = inlined_call_operand.vmem [shape: f32[1,32], index: 3, kind: input, shape index: {}]
  %s4 = inlined_call_operand.vmem [shape: bf16[2,32,96], index: 4, kind: input, shape index: {}]
  %s5 = inlined_call_operand.vmem [shape: f32[2,1,96], index: 5, kind: input, shape index: {}]
  %s6 = inlined_call_operand.vmem [shape: bf16[2,32,32], index: 6, kind: input, shape index: {}]
  %s7 = inlined_call_operand.vmem [shape: f32[2,1,32], index: 7, kind: input, shape index: {}]
  %s8 = inlined_call_operand.vmem [shape: f32[2,1,32], index: 8, kind: input, shape index: {}]
  %s9 = inlined_call_operand.vmem [shape: f32[2,1,32], index: 9, kind: input, shape index: {}]
  %s10 = inlined_call_operand.vmem [shape: bf16[2,32,64], index: 10, kind: input, shape index: {}]
  %s11 = inlined_call_operand.vmem [shape: f32[2,1,64], index: 11, kind: input, shape index: {}]
  %s12 = inlined_call_operand.vmem [shape: bf16[2,64,32], index: 12, kind: input, shape index: {}]
  %s13 = inlined_call_operand.vmem [shape: f32[2,1,32], index: 13, kind: input, shape index: {}]
  %s14 = inlined_call_operand.vmem [shape: f32[2,1,32], index: 14, kind: input, shape index: {}]
  %s15 = inlined_call_operand.vmem [shape: f32[2,1,32], index: 15, kind: input, shape index: {}]
  %s16 = inlined_call_operand.hbm [shape: f32[2,8,32], index: 16, kind: output, shape index: {}]
  %s17 = sld [smem:[#allocation0]]
  $region74: #{model_forward.1} parent=0
    _
  %s19 = ssub.s32 1, %s17
  %s20 = scalar_select 0, %s19, %s17
  $region1: #{model_forward.1} parent=0
    #allocation2 [shape = 'u8[8192]{0}', space=vmem, size = 0x2000, scoped, tag = 'output window, operand 0, single buffered']
    #allocation3 [shape = 's32[1]{0}', space=sflag, size = 0x4, scoped, tag = 'scoped memory for model_forward.1']
    %21 = vsyncpa [#allocation3], 0
    // Predicated region
    $region2: #{model_forward.1} parent=1 // pred_check
      _
    $region3: #{model_forward.1} parent=1 // pred_check_branch
      %23 = sbr.rel (0) target = $region5
    $region4: #{model_forward.1} parent=1 // pred_region
      _
    $region5: #{model_forward.1} parent=1 // pred_fallthru
      _
    // Predicated region
    $region6: #{model_forward.1} parent=1 // pred_check
      _
    $region7: #{model_forward.1} parent=1 // pred_check_branch
      %25 = sbr.rel (0) target = $region9
    $region8: #{model_forward.1} parent=1 // pred_region
      _
    $region9: #{model_forward.1} parent=1 // pred_fallthru
      _
    // Predicated region
    $region10: #{model_forward.1} parent=1 // pred_check
      _
    $region11: #{model_forward.1} parent=1 // pred_check_branch
      %27 = sbr.rel (0) target = $region13
    $region12: #{model_forward.1} parent=1 // pred_region
      _
    $region13: #{model_forward.1} parent=1 // pred_fallthru
      _
    // Predicated region
    $region14: #{model_forward.1} parent=1 // pred_check
      _
    $region15: #{model_forward.1} parent=1 // pred_check_branch
      %29 = sbr.rel (0) target = $region17
    $region16: #{model_forward.1} parent=1 // pred_region
      _
    $region17: #{model_forward.1} parent=1 // pred_fallthru
      _
    // Predicated region
    $region18: #{model_forward.1} parent=1 // pred_check
      _
    $region19: #{model_forward.1} parent=1 // pred_check_branch
      %31 = sbr.rel (0) target = $region21
    $region20: #{model_forward.1} parent=1 // pred_region
      _
    $region21: #{model_forward.1} parent=1 // pred_fallthru
      _
    // Predicated region
    $region22: #{model_forward.1} parent=1 // pred_check
      _
    $region23: #{model_forward.1} parent=1 // pred_check_branch
      %33 = sbr.rel (0) target = $region25
    $region24: #{model_forward.1} parent=1 // pred_region
      _
    $region25: #{model_forward.1} parent=1 // pred_fallthru
      _
    // Predicated region
    $region26: #{model_forward.1} parent=1 // pred_check
      _
    $region27: #{model_forward.1} parent=1 // pred_check_branch
      %35 = sbr.rel (0) target = $region29
    $region28: #{model_forward.1} parent=1 // pred_region
      _
    $region29: #{model_forward.1} parent=1 // pred_fallthru
      _
    // Predicated region
    $region30: #{model_forward.1} parent=1 // pred_check
      _
    $region31: #{model_forward.1} parent=1 // pred_check_branch
      %37 = sbr.rel (0) target = $region33
    $region32: #{model_forward.1} parent=1 // pred_region
      _
    $region33: #{model_forward.1} parent=1 // pred_fallthru
      _
    // Predicated region
    $region34: #{model_forward.1} parent=1 // pred_check
      _
    $region35: #{model_forward.1} parent=1 // pred_check_branch
      %39 = sbr.rel (0) target = $region37
    $region36: #{model_forward.1} parent=1 // pred_region
      _
    $region37: #{model_forward.1} parent=1 // pred_fallthru
      _
    // Predicated region
    $region38: #{model_forward.1} parent=1 // pred_check
      _
    $region39: #{model_forward.1} parent=1 // pred_check_branch
      %41 = sbr.rel (0) target = $region41
    $region40: #{model_forward.1} parent=1 // pred_region
      _
    $region41: #{model_forward.1} parent=1 // pred_fallthru
      _
    // Predicated region
    $region42: #{model_forward.1} parent=1 // pred_check
      _
    $region43: #{model_forward.1} parent=1 // pred_check_branch
      %43 = sbr.rel (0) target = $region45
    $region44: #{model_forward.1} parent=1 // pred_region
      _
    $region45: #{model_forward.1} parent=1 // pred_fallthru
      _
    // Predicated region
    $region46: #{model_forward.1} parent=1 // pred_check
      _
    $region47: #{model_forward.1} parent=1 // pred_check_branch
      %45 = sbr.rel (0) target = $region49
    $region48: #{model_forward.1} parent=1 // pred_region
      _
    $region49: #{model_forward.1} parent=1 // pred_fallthru
      _
    // Predicated region
    $region50: #{model_forward.1} parent=1 // pred_check
      _
    $region51: #{model_forward.1} parent=1 // pred_check_branch
      %47 = sbr.rel (0) target = $region53
    $region52: #{model_forward.1} parent=1 // pred_region
      _
    $region53: #{model_forward.1} parent=1 // pred_fallthru
      _
    // Predicated region
    $region54: #{model_forward.1} parent=1 // pred_check
      _
    $region55: #{model_forward.1} parent=1 // pred_check_branch
      %49 = sbr.rel (0) target = $region57
    $region56: #{model_forward.1} parent=1 // pred_region
      _
    $region57: #{model_forward.1} parent=1 // pred_fallthru
      _
    // Predicated region
    $region58: #{model_forward.1} parent=1 // pred_check
      _
    $region59: #{model_forward.1} parent=1 // pred_check_branch
      %51 = sbr.rel (0) target = $region61
    $region60: #{model_forward.1} parent=1 // pred_region
      _
    $region61: #{model_forward.1} parent=1 // pred_fallthru
      _
    // Predicated region
    $region62: #{model_forward.1} parent=1 // pred_check
      _
    $region63: #{model_forward.1} parent=1 // pred_check_branch
      %53 = sbr.rel (0) target = $region65
    $region64: #{model_forward.1} parent=1 // pred_region
      _
    $region65: #{model_forward.1} parent=1 // pred_fallthru
      _
    %v55 = vld [vmem:[%s0] sm:$0xff]
    %v56 = vld [vmem:[%s0 + $0x8] sm:$0xff]
    %v57 = vld [vmem:[%s1] sm:$0x1]
    %v58 = vld [vmem:[%s1 + $0x1] sm:$0x1]
    %v61 = vperm.slane %v57, 0
    %v62 = vperm.slane %v58, 0
    %v65 = vld [vmem:[%s2] sm:$0x1]
    %v66 = vld [vmem:[%s3] sm:$0x1]
    %vm67 = vcmask 261120
    %v68 = vsel %vm67, %v55, 0.0
    %69 = vadd.xlane.f32.xlu0 %v68
    %v70 = vpop.xlane.xlu0 %69
    %v71 = vsel %vm67, %v56, 0.0
    %72 = vadd.xlane.f32.xlu0 %v71
    %v73 = vpop.xlane.xlu0 %72
    %v74 = vrcp.pop 32.0
    %v75 = vmul.f32 32.0, %v74
    %v76 = vsub.f32 1.0, %v75
    %v77 = vmul.f32 %v74, %v76
    %v78 = vadd.f32 %v74, %v77
    %vm79 = vweird.f32 %v74
    %v80 = vsel %vm79, %v74, %v78
    %v81 = vmul.f32 %v70, %v80
    %v82 = vmul.f32 %v73, %v80
    %v83 = vsub.f32 %v55, %v81
    %v84 = vsub.f32 %v56, %v82
    %v85 = vmul.f32 %v83, %v83
    %v86 = vmul.f32 %v84, %v84
    %v87 = vsel %vm67, %v85, 0.0
    %88 = vadd.xlane.f32.xlu0 %v87
    %v89 = vpop.xlane.xlu0 %88
    %v90 = vsel %vm67, %v86, 0.0
    %91 = vadd.xlane.f32.xlu0 %v90
    %v92 = vpop.xlane.xlu0 %91
    %v93 = vmul.f32 %v89, %v80
    %v94 = vmul.f32 %v92, %v80
    %v95 = vadd.f32 %v93, 1e-05
    %v96 = vadd.f32 %v94, 1e-05
    %v97 = vrsqrt.pop %v95
    %v98 = vmul.f32 %v97, %v95
    %v99 = vmul.f32 %v98, %v97
    %v100 = vmul.f32 0.5, %v99
    %v101 = vsub.f32 1.5, %v100
    %v102 = vmul.f32 %v97, %v101
    %vm103 = vweird.f32 %v95
    %vm104 = vweird.f32 %v97
    %vm105 = vmor %vm103, %vm104
    %v106 = vsel %vm105, %v97, %v102
    %v107 = vrsqrt.pop %v96
    %v108 = vmul.f32 %v107, %v96
    %v109 = vmul.f32 %v108, %v107
    %v110 = vmul.f32 0.5, %v109
    %v111 = vsub.f32 1.5, %v110
    %v112 = vmul.f32 %v107, %v111
    %vm113 = vweird.f32 %v96
    %vm114 = vweird.f32 %v107
    %vm115 = vmor %vm113, %vm114
    %v116 = vsel %vm115, %v107, %v112
    %v117 = vmul.f32 %v83, %v106
    %v118 = vmul.f32 %v84, %v116
    %v120 = vperm.slane %v65, 0
    %v122 = vmul.f32 %v117, %v120
    %v123 = vmul.f32 %v118, %v120
    %v125 = vperm.slane %v66, 0
    %v127 = vadd.f32 %v122, %v125
    %v128 = vadd.f32 %v123, %v125
    %v129 = vld [vmem:[%s4] sm:$0xf]
    %v130 = vld [vmem:[%s4 + $0x4] sm:$0xf]
    %v131 = vld [vmem:[%s4 + $0x8] sm:$0xf]
    %v132 = vld [vmem:[%s4 + $0xc] sm:$0xf]
    %v133 = vld [vmem:[%s6] sm:$0xf]
    %v134 = vld [vmem:[%s6 + $0x4] sm:$0xf]
    %v135 = vld [vmem:[%s6 + $0x8] sm:$0xf]
    %v136 = vld [vmem:[%s6 + $0xc] sm:$0xf]
    %v137 = vpack.c.bf16 %v128, %v127
    %v138 = vld [vmem:[%s5] sm:$0x1]
    %v140 = vperm.slane %v138, 0
    %v146 = vunpack.c.l.b16 %v129
    %v147 = vunpack.c.l.b16 %v130
    %v148 = vunpack.c.l.b16 %v131
    %v149 = vunpack.c.l.b16 %v132
    %v150 = vpack.c.b16 %v147, %v146
    %v151 = vpack.c.b16 %v149, %v148
    %v155 = vsel %vm67, %v137, 0
    %157 = vmatpush.bf16.msra.mxu0 0
    %158 = vmatpush.bf16.msra.mxu0 0
    %159 = vmatpush.bf16.msra.mxu0 0
    %160 = vmatpush.bf16.msra.mxu0 0
    %161 = vmatpush.bf16.msra.mxu0 0
    %162 = vmatpush.bf16.msra.mxu0 0
    %163 = vmatpush.bf16.msra.mxu0 %v151
    %164 = vmatpush.bf16.msra.mxu0 %v150
    %165 = vmatmul.bf16.gmra.mxu0 %v155
    %v166 = vpop.f32.mrf.mxu0
    %v167 = vadd.f32 %v140, %v166
    %v168 = vpop.f32.mrf.mxu0
    %v169 = vadd.f32 %v140, %v168
    %170 = vdwg.mxu0
    %v171 = vmul.f32 %v167, 0.25
    %v172 = vmul.f32 %v169, 0.25
    %v173 = vpack.c.bf16 %v171, %v171
    %v174 = vpack.c.bf16 %v172, %v172
    %v175 = vpack.c.bf16 %v167, %v167
    %v176 = vpack.c.bf16 %v169, %v169
    %v178 = vunpack.c.l.b16 %v175
    %v179 = vpack.c.b16 %v178, %v178
    %180 = vrot.lane.b32.xlu0 %v179, 96
    %v181 = vpop.permute.xlu0 %180
    %vm182 = vcmask 130048
    %v184 = vsel %vm182, %v173, 0
    %v187 = vsel %vm182, %v181, 0
    %189 = vmatpush.bf16.xpose.msra.mxu0 0
    %190 = vmatpush.bf16.xpose.msra.mxu0 0
    %191 = vmatpush.bf16.xpose.msra.mxu0 0
    %192 = vmatpush.bf16.xpose.msra.mxu0 0
    %193 = vmatpush.bf16.xpose.msra.mxu0 0
    %194 = vmatpush.bf16.xpose.msra.mxu0 0
    %195 = vmatpush.bf16.xpose.msra.mxu0 0
    %196 = vmatpush.bf16.xpose.msra.mxu0 %v187
    %197 = vmatmul.bf16.gmra.mxu0 %v184
    %v198 = vpop.f32.mrf.mxu0
    %v199 = vadd.f32 %v61, %v198
    %v200 = vpop.f32.mrf.mxu0
    %201 = vdwg.mxu0
    %v203 = vunpack.c.l.b16 %v176
    %v204 = vpack.c.b16 %v203, %v203
    %205 = vrot.lane.b32.xlu0 %v204, 96
    %v206 = vpop.permute.xlu0 %205
    %v208 = vsel %vm182, %v174, 0
    %v211 = vsel %vm182, %v206, 0
    %213 = vmatpush.bf16.xpose.msra.mxu0 0
    %214 = vmatpush.bf16.xpose.msra.mxu0 0
    %215 = vmatpush.bf16.xpose.msra.mxu0 0
    %216 = vmatpush.bf16.xpose.msra.mxu0 0
    %217 = vmatpush.bf16.xpose.msra.mxu0 0
    %218 = vmatpush.bf16.xpose.msra.mxu0 0
    %219 = vmatpush.bf16.xpose.msra.mxu0 0
    %220 = vmatpush.bf16.xpose.msra.mxu0 %v211
    %221 = vmatmul.bf16.gmra.mxu0 %v208
    %v222 = vpop.f32.mrf.mxu0
    %v223 = vadd.f32 %v62, %v222
    %v224 = vpop.f32.mrf.mxu0
    %225 = vdwg.mxu0
    %vm226 = vcmask 64512
    %v227 = vsel %vm226, %v199, -inf
    %228 = vmax.xlane.f32.xlu0 %v227
    %v229 = vpop.xlane.xlu0 %228
    %v230 = vsel %vm226, %v223, -inf
    %231 = vmax.xlane.f32.xlu0 %v230
    %v232 = vpop.xlane.xlu0 %231
    %v233 = vsub.f32 %v199, %v229
    %v234 = vsub.f32 %v223, %v232
    %v235 = vmul.f32 %v233, 1.442695
    %v236 = vpow.pop %v235
    %v237 = vmul.f32 %v234, 1.442695
    %v238 = vpow.pop %v237
    %v239 = vsel %vm226, %v236, 0.0
    %240 = vadd.xlane.f32.xlu0 %v239
    %v241 = vpop.xlane.xlu0 %240
    %v242 = vsel %vm226, %v238, 0.0
    %243 = vadd.xlane.f32.xlu0 %v242
    %v244 = vpop.xlane.xlu0 %243
    %v245 = vrcp.pop %v241
    %v246 = vrcp.pop %v244
    %v247 = vmul.f32 %v236, %v245
    %v248 = vmul.f32 %v238, %v246
    %v249 = vpack.c.bf16 %v247, %v247
    %v250 = vpack.c.bf16 %v248, %v248
    %251 = vrot.lane.b32.xlu0 %v179, 64
    %v252 = vpop.permute.xlu0 %251
    %v254 = vsel %vm226, %v249, 0
    %vm256 = vcmask 1043456
    %v258 = vsel %vm256, %v252, 0
    %260 = vmatpush.bf16.msra.mxu0 0
    %261 = vmatpush.bf16.msra.mxu0 0
    %262 = vmatpush.bf16.msra.mxu0 0
    %263 = vmatpush.bf16.msra.mxu0 0
    %264 = vmatpush.bf16.msra.mxu0 0
    %265 = vmatpush.bf16.msra.mxu0 0
    %266 = vmatpush.bf16.msra.mxu0 0
    %267 = vmatpush.bf16.msra.mxu0 %v258
    %268 = vmatmul.bf16.gmra.mxu0 %v254
    %v269 = vpop.f32.mrf.mxu0
    %v270 = vadd.f32 0.0, %v269
    %v271 = vpop.f32.mrf.mxu0
    %272 = vdwg.mxu0
    %273 = vrot.lane.b32.xlu0 %v204, 64
    %v274 = vpop.permute.xlu0 %273
    %v276 = vsel %vm226, %v250, 0
    %v279 = vsel %vm256, %v274, 0
    %281 = vmatpush.bf16.msra.mxu0 0
    %282 = vmatpush.bf16.msra.mxu0 0
    %283 = vmatpush.bf16.msra.mxu0 0
    %284 = vmatpush.bf16.msra.mxu0 0
    %285 = vmatpush.bf16.msra.mxu0 0
    %286 = vmatpush.bf16.msra.mxu0 0
    %287 = vmatpush.bf16.msra.mxu0 0
    %288 = vmatpush.bf16.msra.mxu0 %v279
    %289 = vmatmul.bf16.gmra.mxu0 %v276
    %v290 = vpop.f32.mrf.mxu0
    %v291 = vadd.f32 0.0, %v290
    %v292 = vpop.f32.mrf.mxu0
    %293 = vdwg.mxu0
    %v294 = vpack.c.bf16 %v291, %v270
    %v296 = vunpack.c.l.b16 %v173
    %v297 = vpack.c.b16 %v296, %v296
    %298 = vrot.lane.b32.xlu0 %v297, 112
    %v299 = vpop.permute.xlu0 %298
    %300 = vrot.lane.b32.xlu0 %v179, 80
    %v301 = vpop.permute.xlu0 %300
    %v303 = vsel %vm182, %v299, 0
    %v306 = vsel %vm182, %v301, 0
    %308 = vmatpush.bf16.xpose.msra.mxu0 0
    %309 = vmatpush.bf16.xpose.msra.mxu0 0
    %310 = vmatpush.bf16.xpose.msra.mxu0 0
    %311 = vmatpush.bf16.xpose.msra.mxu0 0
    %312 = vmatpush.bf16.xpose.msra.mxu0 0
    %313 = vmatpush.bf16.xpose.msra.mxu0 0
    %314 = vmatpush.bf16.xpose.msra.mxu0 0
    %315 = vmatpush.bf16.xpose.msra.mxu0 %v306
    %316 = vmatmul.bf16.gmra.mxu0 %v303
    %v317 = vpop.f32.mrf.mxu0
    %v318 = vadd.f32 %v61, %v317
    %v319 = vpop.f32.mrf.mxu0
    %320 = vdwg.mxu0
    %v322 = vunpack.c.l.b16 %v174
    %v323 = vpack.c.b16 %v322, %v322
    %324 = vrot.lane.b32.xlu0 %v323, 112
    %v325 = vpop.permute.xlu0 %324
    %326 = vrot.lane.b32.xlu0 %v204, 80
    %v327 = vpop.permute.xlu0 %326
    %v329 = vsel %vm182, %v325, 0
    %v332 = vsel %vm182, %v327, 0
    %334 = vmatpush.bf16.xpose.msra.mxu0 0
    %335 = vmatpush.bf16.xpose.msra.mxu0 0
    %336 = vmatpush.bf16.xpose.msra.mxu0 0
    %337 = vmatpush.bf16.xpose.msra.mxu0 0
    %338 = vmatpush.bf16.xpose.msra.mxu0 0
    %339 = vmatpush.bf16.xpose.msra.mxu0 0
    %340 = vmatpush.bf16.xpose.msra.mxu0 0
    %341 = vmatpush.bf16.xpose.msra.mxu0 %v332
    %342 = vmatmul.bf16.gmra.mxu0 %v329
    %v343 = vpop.f32.mrf.mxu0
    %v344 = vadd.f32 %v62, %v343
    %v345 = vpop.f32.mrf.mxu0
    %346 = vdwg.mxu0
    %v347 = vsel %vm226, %v318, -inf
    %348 = vmax.xlane.f32.xlu0 %v347
    %v349 = vpop.xlane.xlu0 %348
    %v350 = vsel %vm226, %v344, -inf
    %351 = vmax.xlane.f32.xlu0 %v350
    %v352 = vpop.xlane.xlu0 %351
    %v353 = vsub.f32 %v318, %v349
    %v354 = vsub.f32 %v344, %v352
    %v355 = vmul.f32 %v353, 1.442695
    %v356 = vpow.pop %v355
    %v357 = vmul.f32 %v354, 1.442695
    %v358 = vpow.pop %v357
    %v359 = vsel %vm226, %v356, 0.0
    %360 = vadd.xlane.f32.xlu0 %v359
    %v361 = vpop.xlane.xlu0 %360
    %v362 = vsel %vm226, %v358, 0.0
    %363 = vadd.xlane.f32.xlu0 %v362
    %v364 = vpop.xlane.xlu0 %363
    %v365 = vrcp.pop %v361
    %v366 = vrcp.pop %v364
    %v367 = vmul.f32 %v356, %v365
    %v368 = vmul.f32 %v358, %v366
    %v369 = vpack.c.bf16 %v367, %v367
    %v370 = vpack.c.bf16 %v368, %v368
    %371 = vrot.lane.b32.xlu0 %v179, 48
    %v372 = vpop.permute.xlu0 %371
    %v374 = vsel %vm226, %v369, 0
    %v377 = vsel %vm256, %v372, 0
    %379 = vmatpush.bf16.msra.mxu0 0
    %380 = vmatpush.bf16.msra.mxu0 0
    %381 = vmatpush.bf16.msra.mxu0 0
    %382 = vmatpush.bf16.msra.mxu0 0
    %383 = vmatpush.bf16.msra.mxu0 0
    %384 = vmatpush.bf16.msra.mxu0 0
    %385 = vmatpush.bf16.msra.mxu0 0
    %386 = vmatpush.bf16.msra.mxu0 %v377
    %387 = vmatmul.bf16.gmra.mxu0 %v374
    %v388 = vpop.f32.mrf.mxu0
    %v389 = vadd.f32 0.0, %v388
    %v390 = vpop.f32.mrf.mxu0
    %391 = vdwg.mxu0
    %392 = vrot.lane.b32.xlu0 %v204, 48
    %v393 = vpop.permute.xlu0 %392
    %v395 = vsel %vm226, %v370, 0
    %v398 = vsel %vm256, %v393, 0
    %400 = vmatpush.bf16.msra.mxu0 0
    %401 = vmatpush.bf16.msra.mxu0 0
    %402 = vmatpush.bf16.msra.mxu0 0
    %403 = vmatpush.bf16.msra.mxu0 0
    %404 = vmatpush.bf16.msra.mxu0 0
    %405 = vmatpush.bf16.msra.mxu0 0
    %406 = vmatpush.bf16.msra.mxu0 0
    %407 = vmatpush.bf16.msra.mxu0 %v398
    %408 = vmatmul.bf16.gmra.mxu0 %v395
    %v409 = vpop.f32.mrf.mxu0
    %v410 = vadd.f32 0.0, %v409
    %v411 = vpop.f32.mrf.mxu0
    %412 = vdwg.mxu0
    %v413 = vpack.c.bf16 %v410, %v389
    %v416 = vunpack.c.l.b16 %v135
    %v417 = vunpack.c.l.b16 %v136
    %v418 = vpack.c.b16 %v417, %v416
    %v421 = vsel %vm182, %v413, 0
    %423 = vmatpush.bf16.msra.mxu0 0
    %424 = vmatpush.bf16.msra.mxu0 0
    %425 = vmatpush.bf16.msra.mxu0 0
    %426 = vmatpush.bf16.msra.mxu0 0
    %427 = vmatpush.bf16.msra.mxu0 0
    %428 = vmatpush.bf16.msra.mxu0 0
    %429 = vmatpush.bf16.msra.mxu0 0
    %430 = vmatpush.bf16.msra.mxu0 %v418
    %431 = vmatmul.bf16.gmra.mxu0 %v421
    %v432 = vpop.f32.mrf.mxu0
    %v433 = vadd.f32 0.0, %v432
    %v434 = vpop.f32.mrf.mxu0
    %v435 = vadd.f32 0.0, %v434
    %436 = vdwg.mxu0
    %v439 = vunpack.c.l.b16 %v133
    %v440 = vunpack.c.l.b16 %v134
    %v441 = vpack.c.b16 %v440, %v439
    %v444 = vsel %vm182, %v294, 0
    %446 = vmatpush.bf16.msra.mxu0 0
    %447 = vmatpush.bf16.msra.mxu0 0
    %448 = vmatpush.bf16.msra.mxu0 0
    %449 = vmatpush.bf16.msra.mxu0 0
    %450 = vmatpush.bf16.msra.mxu0 0
    %451 = vmatpush.bf16.msra.mxu0 0
    %452 = vmatpush.bf16.msra.mxu0 0
    %453 = vmatpush.bf16.msra.mxu0 %v441
    %454 = vmatmul.bf16.gmra.mxu0 %v444
    %v455 = vpop.f32.mrf.mxu0
    %v456 = vadd.f32 %v433, %v455
    %v457 = vpop.f32.mrf.mxu0
    %v458 = vadd.f32 %v435, %v457
    %459 = vdwg.mxu0
    %v460 = vld [vmem:[%s7] sm:$0x1]
    %v462 = vperm.slane %v460, 0
    %v464 = vadd.f32 %v456, %v462
    %v465 = vadd.f32 %v458, %v462
    %v466 = vadd.f32 %v127, %v464
    %v467 = vadd.f32 %v128, %v465
    %v468 = vld [vmem:[%s8] sm:$0x1]
    %v469 = vld [vmem:[%s9] sm:$0x1]
    %v470 = vsel %vm67, %v466, 0.0
    %471 = vadd.xlane.f32.xlu0 %v470
    %v472 = vpop.xlane.xlu0 %471
    %v473 = vsel %vm67, %v467, 0.0
    %474 = vadd.xlane.f32.xlu0 %v473
    %v475 = vpop.xlane.xlu0 %474
    %v476 = vmul.f32 %v472, %v80
    %v477 = vmul.f32 %v475, %v80
    %v478 = vsub.f32 %v466, %v476
    %v479 = vsub.f32 %v467, %v477
    %v480 = vmul.f32 %v478, %v478
    %v481 = vmul.f32 %v479, %v479
    %v482 = vsel %vm67, %v480, 0.0
    %483 = vadd.xlane.f32.xlu0 %v482
    %v484 = vpop.xlane.xlu0 %483
    %v485 = vsel %vm67, %v481, 0.0
    %486 = vadd.xlane.f32.xlu0 %v485
    %v487 = vpop.xlane.xlu0 %486
    %v488 = vmul.f32 %v484, %v80
    %v489 = vmul.f32 %v487, %v80
    %v490 = vadd.f32 %v488, 1e-05
    %v491 = vadd.f32 %v489, 1e-05
    %v492 = vrsqrt.pop %v490
    %v493 = vmul.f32 %v492, %v490
    %v494 = vmul.f32 %v493, %v492
    %v495 = vmul.f32 0.5, %v494
    %v496 = vsub.f32 1.5, %v495
    %v497 = vmul.f32 %v492, %v496
    %vm498 = vweird.f32 %v490
    %vm499 = vweird.f32 %v492
    %vm500 = vmor %vm498, %vm499
    %v501 = vsel %vm500, %v492, %v497
    %v502 = vrsqrt.pop %v491
    %v503 = vmul.f32 %v502, %v491
    %v504 = vmul.f32 %v503, %v502
    %v505 = vmul.f32 0.5, %v504
    %v506 = vsub.f32 1.5, %v505
    %v507 = vmul.f32 %v502, %v506
    %vm508 = vweird.f32 %v491
    %vm509 = vweird.f32 %v502
    %vm510 = vmor %vm508, %vm509
    %v511 = vsel %vm510, %v502, %v507
    %v512 = vmul.f32 %v478, %v501
    %v513 = vmul.f32 %v479, %v511
    %v515 = vperm.slane %v468, 0
    %v517 = vmul.f32 %v512, %v515
    %v518 = vmul.f32 %v513, %v515
    %v520 = vperm.slane %v469, 0
    %v522 = vadd.f32 %v517, %v520
    %v523 = vadd.f32 %v518, %v520
    %v524 = vpack.c.bf16 %v523, %v522
    %v525 = vld [vmem:[%s10] sm:$0xf]
    %v526 = vld [vmem:[%s10 + $0x4] sm:$0xf]
    %v527 = vld [vmem:[%s10 + $0x8] sm:$0xf]
    %v528 = vld [vmem:[%s10 + $0xc] sm:$0xf]
    %v529 = vld [vmem:[%s11] sm:$0x1]
    %v531 = vperm.slane %v529, 0
    %v537 = vunpack.c.l.b16 %v525
    %v538 = vunpack.c.l.b16 %v526
    %v539 = vunpack.c.l.b16 %v527
    %v540 = vunpack.c.l.b16 %v528
    %v541 = vpack.c.b16 %v538, %v537
    %v542 = vpack.c.b16 %v540, %v539
    %v546 = vsel %vm67, %v524, 0
    %548 = vmatpush.bf16.msra.mxu0 0
    %549 = vmatpush.bf16.msra.mxu0 0
    %550 = vmatpush.bf16.msra.mxu0 0
    %551 = vmatpush.bf16.msra.mxu0 0
    %552 = vmatpush.bf16.msra.mxu0 0
    %553 = vmatpush.bf16.msra.mxu0 0
    %554 = vmatpush.bf16.msra.mxu0 %v542
    %555 = vmatpush.bf16.msra.mxu0 %v541
    %556 = vmatmul.bf16.gmra.mxu0 %v546
    %v557 = vpop.f32.mrf.mxu0
    %v558 = vadd.f32 %v531, %v557
    %v559 = vpop.f32.mrf.mxu0
    %v560 = vadd.f32 %v531, %v559
    %561 = vdwg.mxu0
    %v562 = vmul.f32 %v558, %v558
    %v563 = vmul.f32 %v560, %v560
    %v564 = vmul.f32 %v558, %v562
    %v565 = vmul.f32 %v560, %v563
    %v566 = vmul.f32 %v564, 0.044715
    %v567 = vmul.f32 %v565, 0.044715
    %v568 = vadd.f32 %v558, %v566
    %v569 = vadd.f32 %v560, %v567
    %v570 = vmul.f32 %v568, 0.7978846
    %v571 = vmul.f32 %v569, 0.7978846
    %v572 = vtanh.pop %v570
    %v573 = vtanh.pop %v571
    %v574 = vadd.f32 %v572, 1.0
    %v575 = vadd.f32 %v573, 1.0
    %v576 = vmul.f32 %v574, 0.5
    %v577 = vmul.f32 %v575, 0.5
    %v578 = vmul.f32 %v558, %v576
    %v579 = vmul.f32 %v560, %v577
    %v580 = vpack.c.bf16 %v579, %v578
    %v581 = vld [vmem:[%s12] sm:$0xf]
    %v582 = vld [vmem:[%s12 + $0x4] sm:$0xf]
    %v583 = vld [vmem:[%s12 + $0x8] sm:$0xf]
    %v584 = vld [vmem:[%s12 + $0xc] sm:$0xf]
    %v585 = vld [vmem:[%s12 + $0x10] sm:$0xf]
    %v586 = vld [vmem:[%s12 + $0x14] sm:$0xf]
    %v587 = vld [vmem:[%s12 + $0x18] sm:$0xf]
    %v588 = vld [vmem:[%s12 + $0x1c] sm:$0xf]
    %v589 = vld [vmem:[%s13] sm:$0x1]
    %v591 = vperm.slane %v589, 0
    %v601 = vunpack.c.l.b16 %v581
    %v602 = vunpack.c.l.b16 %v582
    %v603 = vunpack.c.l.b16 %v583
    %v604 = vunpack.c.l.b16 %v584
    %v605 = vunpack.c.l.b16 %v585
    %v606 = vunpack.c.l.b16 %v586
    %v607 = vunpack.c.l.b16 %v587
    %v608 = vunpack.c.l.b16 %v588
    %v609 = vpack.c.b16 %v602, %v601
    %v610 = vpack.c.b16 %v604, %v603
    %v611 = vpack.c.b16 %v606, %v605
    %v612 = vpack.c.b16 %v608, %v607
    %vm617 = vcmask 523264
    %v619 = vsel %vm617, %v580, 0
    %621 = vmatpush.bf16.msra.mxu0 0
    %622 = vmatpush.bf16.msra.mxu0 0
    %623 = vmatpush.bf16.msra.mxu0 0
    %624 = vmatpush.bf16.msra.mxu0 0
    %625 = vmatpush.bf16.msra.mxu0 %v612
    %626 = vmatpush.bf16.msra.mxu0 %v611
    %627 = vmatpush.bf16.msra.mxu0 %v610
    %628 = vmatpush.bf16.msra.mxu0 %v609
    %629 = vmatmul.bf16.gmra.mxu0 %v619
    %v630 = vpop.f32.mrf.mxu0
    %v631 = vadd.f32 %v591, %v630
    %v632 = vpop.f32.mrf.mxu0
    %v633 = vadd.f32 %v591, %v632
    %634 = vdwg.mxu0
    %v635 = vadd.f32 %v522, %v631
    %v636 = vadd.f32 %v523, %v633
    %v637 = vld [vmem:[%s14] sm:$0x1]
    %v638 = vld [vmem:[%s15] sm:$0x1]
    %v639 = vsel %vm67, %v635, 0.0
    %640 = vadd.xlane.f32.xlu0 %v639
    %v641 = vpop.xlane.xlu0 %640
    %v642 = vsel %vm67, %v636, 0.0
    %643 = vadd.xlane.f32.xlu0 %v642
    %v644 = vpop.xlane.xlu0 %643
    %v645 = vmul.f32 %v641, %v80
    %v646 = vmul.f32 %v644, %v80
    %v647 = vsub.f32 %v635, %v645
    %v648 = vsub.f32 %v636, %v646
    %v649 = vmul.f32 %v647, %v647
    %v650 = vmul.f32 %v648, %v648
    %v651 = vsel %vm67, %v649, 0.0
    %652 = vadd.xlane.f32.xlu0 %v651
    %v653 = vpop.xlane.xlu0 %652
    %v654 = vsel %vm67, %v650, 0.0
    %655 = vadd.xlane.f32.xlu0 %v654
    %v656 = vpop.xlane.xlu0 %655
    %v657 = vmul.f32 %v653, %v80
    %v658 = vmul.f32 %v656, %v80
    %v659 = vadd.f32 %v657, 1e-05
    %v660 = vadd.f32 %v658, 1e-05
    %v661 = vrsqrt.pop %v659
    %v662 = vmul.f32 %v661, %v659
    %v663 = vmul.f32 %v662, %v661
    %v664 = vmul.f32 0.5, %v663
    %v665 = vsub.f32 1.5, %v664
    %v666 = vmul.f32 %v661, %v665
    %vm667 = vweird.f32 %v659
    %vm668 = vweird.f32 %v661
    %vm669 = vmor %vm667, %vm668
    %v670 = vsel %vm669, %v661, %v666
    %v671 = vrsqrt.pop %v660
    %v672 = vmul.f32 %v671, %v660
    %v673 = vmul.f32 %v672, %v671
    %v674 = vmul.f32 0.5, %v673
    %v675 = vsub.f32 1.5, %v674
    %v676 = vmul.f32 %v671, %v675
    %vm677 = vweird.f32 %v660
    %vm678 = vweird.f32 %v671
    %vm679 = vmor %vm677, %vm678
    %v680 = vsel %vm679, %v671, %v676
    %v681 = vmul.f32 %v647, %v670
    %v682 = vmul.f32 %v648, %v680
    %v684 = vperm.slane %v637, 0
    %v686 = vmul.f32 %v681, %v684
    %v687 = vmul.f32 %v682, %v684
    %v689 = vperm.slane %v638, 0
    %v691 = vadd.f32 %v686, %v689
    %v692 = vadd.f32 %v687, %v689
    %s693 = scalar_lea.vmem %s4, 16
    %v694 = vld [vmem:[%s693] sm:$0xf]
    %v695 = vld [vmem:[%s693 + $0x4] sm:$0xf]
    %v696 = vld [vmem:[%s693 + $0x8] sm:$0xf]
    %v697 = vld [vmem:[%s693 + $0xc] sm:$0xf]
    %s698 = scalar_lea.vmem %s6, 16
    %v699 = vld [vmem:[%s698] sm:$0xf]
    %v700 = vld [vmem:[%s698 + $0x4] sm:$0xf]
    %v701 = vld [vmem:[%s698 + $0x8] sm:$0xf]
    %v702 = vld [vmem:[%s698 + $0xc] sm:$0xf]
    %v703 = vpack.c.bf16 %v692, %v691
    %s704 = scalar_lea.vmem %s5, 1
    %v705 = vld [vmem:[%s704] sm:$0x1]
    %v707 = vperm.slane %v705, 0
    %v713 = vunpack.c.l.b16 %v694
    %v714 = vunpack.c.l.b16 %v695
    %v715 = vunpack.c.l.b16 %v696
    %v716 = vunpack.c.l.b16 %v697
    %v717 = vpack.c.b16 %v714, %v713
    %v718 = vpack.c.b16 %v716, %v715
    %v722 = vsel %vm67, %v703, 0
    %724 = vmatpush.bf16.msra.mxu0 0
    %725 = vmatpush.bf16.msra.mxu0 0
    %726 = vmatpush.bf16.msra.mxu0 0
    %727 = vmatpush.bf16.msra.mxu0 0
    %728 = vmatpush.bf16.msra.mxu0 0
    %729 = vmatpush.bf16.msra.mxu0 0
    %730 = vmatpush.bf16.msra.mxu0 %v718
    %731 = vmatpush.bf16.msra.mxu0 %v717
    %732 = vmatmul.bf16.gmra.mxu0 %v722
    %v733 = vpop.f32.mrf.mxu0
    %v734 = vadd.f32 %v707, %v733
    %v735 = vpop.f32.mrf.mxu0
    %v736 = vadd.f32 %v707, %v735
    %737 = vdwg.mxu0
    %v738 = vmul.f32 %v734, 0.25
    %v739 = vmul.f32 %v736, 0.25
    %v740 = vpack.c.bf16 %v738, %v738
    %v741 = vpack.c.bf16 %v739, %v739
    %v742 = vpack.c.bf16 %v734, %v734
    %v743 = vpack.c.bf16 %v736, %v736
    %v745 = vunpack.c.l.b16 %v742
    %v746 = vpack.c.b16 %v745, %v745
    %747 = vrot.lane.b32.xlu0 %v746, 96
    %v748 = vpop.permute.xlu0 %747
    %v750 = vsel %vm182, %v740, 0
    %v753 = vsel %vm182, %v748, 0
    %755 = vmatpush.bf16.xpose.msra.mxu0 0
    %756 = vmatpush.bf16.xpose.msra.mxu0 0
    %757 = vmatpush.bf16.xpose.msra.mxu0 0
    %758 = vmatpush.bf16.xpose.msra.mxu0 0
    %759 = vmatpush.bf16.xpose.msra.mxu0 0
    %760 = vmatpush.bf16.xpose.msra.mxu0 0
    %761 = vmatpush.bf16.xpose.msra.mxu0 0
    %762 = vmatpush.bf16.xpose.msra.mxu0 %v753
    %763 = vmatmul.bf16.gmra.mxu0 %v750
    %v764 = vpop.f32.mrf.mxu0
    %v765 = vadd.f32 %v61, %v764
    %v766 = vpop.f32.mrf.mxu0
    %767 = vdwg.mxu0
    %v769 = vunpack.c.l.b16 %v743
    %v770 = vpack.c.b16 %v769, %v769
    %771 = vrot.lane.b32.xlu0 %v770, 96
    %v772 = vpop.permute.xlu0 %771
    %v774 = vsel %vm182, %v741, 0
    %v777 = vsel %vm182, %v772, 0
    %779 = vmatpush.bf16.xpose.msra.mxu0 0
    %780 = vmatpush.bf16.xpose.msra.mxu0 0
    %781 = vmatpush.bf16.xpose.msra.mxu0 0
    %782 = vmatpush.bf16.xpose.msra.mxu0 0
    %783 = vmatpush.bf16.xpose.msra.mxu0 0
    %784 = vmatpush.bf16.xpose.msra.mxu0 0
    %785 = vmatpush.bf16.xpose.msra.mxu0 0
    %786 = vmatpush.bf16.xpose.msra.mxu0 %v777
    %787 = vmatmul.bf16.gmra.mxu0 %v774
    %v788 = vpop.f32.mrf.mxu0
    %v789 = vadd.f32 %v62, %v788
    %v790 = vpop.f32.mrf.mxu0
    %791 = vdwg.mxu0
    %v792 = vsel %vm226, %v765, -inf
    %793 = vmax.xlane.f32.xlu0 %v792
    %v794 = vpop.xlane.xlu0 %793
    %v795 = vsel %vm226, %v789, -inf
    %796 = vmax.xlane.f32.xlu0 %v795
    %v797 = vpop.xlane.xlu0 %796
    %v798 = vsub.f32 %v765, %v794
    %v799 = vsub.f32 %v789, %v797
    %v800 = vmul.f32 %v798, 1.442695
    %v801 = vpow.pop %v800
    %v802 = vmul.f32 %v799, 1.442695
    %v803 = vpow.pop %v802
    %v804 = vsel %vm226, %v801, 0.0
    %805 = vadd.xlane.f32.xlu0 %v804
    %v806 = vpop.xlane.xlu0 %805
    %v807 = vsel %vm226, %v803, 0.0
    %808 = vadd.xlane.f32.xlu0 %v807
    %v809 = vpop.xlane.xlu0 %808
    %v810 = vrcp.pop %v806
    %v811 = vrcp.pop %v809
    %v812 = vmul.f32 %v801, %v810
    %v813 = vmul.f32 %v803, %v811
    %v814 = vpack.c.bf16 %v812, %v812
    %v815 = vpack.c.bf16 %v813, %v813
    %816 = vrot.lane.b32.xlu0 %v746, 64
    %v817 = vpop.permute.xlu0 %816
    %v819 = vsel %vm226, %v814, 0
    %v822 = vsel %vm256, %v817, 0
    %824 = vmatpush.bf16.msra.mxu0 0
    %825 = vmatpush.bf16.msra.mxu0 0
    %826 = vmatpush.bf16.msra.mxu0 0
    %827 = vmatpush.bf16.msra.mxu0 0
    %828 = vmatpush.bf16.msra.mxu0 0
    %829 = vmatpush.bf16.msra.mxu0 0
    %830 = vmatpush.bf16.msra.mxu0 0
    %831 = vmatpush.bf16.msra.mxu0 %v822
    %832 = vmatmul.bf16.gmra.mxu0 %v819
    %v833 = vpop.f32.mrf.mxu0
    %v834 = vadd.f32 0.0, %v833
    %v835 = vpop.f32.mrf.mxu0
    %836 = vdwg.mxu0
    %837 = vrot.lane.b32.xlu0 %v770, 64
    %v838 = vpop.permute.xlu0 %837
    %v840 = vsel %vm226, %v815, 0
    %v843 = vsel %vm256, %v838, 0
    %845 = vmatpush.bf16.msra.mxu0 0
    %846 = vmatpush.bf16.msra.mxu0 0
    %847 = vmatpush.bf16.msra.mxu0 0
    %848 = vmatpush.bf16.msra.mxu0 0
    %849 = vmatpush.bf16.msra.mxu0 0
    %850 = vmatpush.bf16.msra.mxu0 0
    %851 = vmatpush.bf16.msra.mxu0 0
    %852 = vmatpush.bf16.msra.mxu0 %v843
    %853 = vmatmul.bf16.gmra.mxu0 %v840
    %v854 = vpop.f32.mrf.mxu0
    %v855 = vadd.f32 0.0, %v854
    %v856 = vpop.f32.mrf.mxu0
    %857 = vdwg.mxu0
    %v858 = vpack.c.bf16 %v855, %v834
    %v860 = vunpack.c.l.b16 %v740
    %v861 = vpack.c.b16 %v860, %v860
    %862 = vrot.lane.b32.xlu0 %v861, 112
    %v863 = vpop.permute.xlu0 %862
    %864 = vrot.lane.b32.xlu0 %v746, 80
    %v865 = vpop.permute.xlu0 %864
    %v867 = vsel %vm182, %v863, 0
    %v870 = vsel %vm182, %v865, 0
    %872 = vmatpush.bf16.xpose.msra.mxu0 0
    %873 = vmatpush.bf16.xpose.msra.mxu0 0
    %874 = vmatpush.bf16.xpose.msra.mxu0 0
    %875 = vmatpush.bf16.xpose.msra.mxu0 0
    %876 = vmatpush.bf16.xpose.msra.mxu0 0
    %877 = vmatpush.bf16.xpose.msra.mxu0 0
    %878 = vmatpush.bf16.xpose.msra.mxu0 0
    %879 = vmatpush.bf16.xpose.msra.mxu0 %v870
    %880 = vmatmul.bf16.gmra.mxu0 %v867
    %v881 = vpop.f32.mrf.mxu0
    %v882 = vadd.f32 %v61, %v881
    %v883 = vpop.f32.mrf.mxu0
    %884 = vdwg.mxu0
    %v886 = vunpack.c.l.b16 %v741
    %v887 = vpack.c.b16 %v886, %v886
    %888 = vrot.lane.b32.xlu0 %v887, 112
    %v889 = vpop.permute.xlu0 %888
    %890 = vrot.lane.b32.xlu0 %v770, 80
    %v891 = vpop.permute.xlu0 %890
    %v893 = vsel %vm182, %v889, 0
    %v896 = vsel %vm182, %v891, 0
    %898 = vmatpush.bf16.xpose.msra.mxu0 0
    %899 = vmatpush.bf16.xpose.msra.mxu0 0
    %900 = vmatpush.bf16.xpose.msra.mxu0 0
    %901 = vmatpush.bf16.xpose.msra.mxu0 0
    %902 = vmatpush.bf16.xpose.msra.mxu0 0
    %903 = vmatpush.bf16.xpose.msra.mxu0 0
    %904 = vmatpush.bf16.xpose.msra.mxu0 0
    %905 = vmatpush.bf16.xpose.msra.mxu0 %v896
    %906 = vmatmul.bf16.gmra.mxu0 %v893
    %v907 = vpop.f32.mrf.mxu0
    %v908 = vadd.f32 %v62, %v907
    %v909 = vpop.f32.mrf.mxu0
    %910 = vdwg.mxu0
    %v911 = vsel %vm226, %v882, -inf
    %912 = vmax.xlane.f32.xlu0 %v911
    %v913 = vpop.xlane.xlu0 %912
    %v914 = vsel %vm226, %v908, -inf
    %915 = vmax.xlane.f32.xlu0 %v914
    %v916 = vpop.xlane.xlu0 %915
    %v917 = vsub.f32 %v882, %v913
    %v918 = vsub.f32 %v908, %v916
    %v919 = vmul.f32 %v917, 1.442695
    %v920 = vpow.pop %v919
    %v921 = vmul.f32 %v918, 1.442695
    %v922 = vpow.pop %v921
    %v923 = vsel %vm226, %v920, 0.0
    %924 = vadd.xlane.f32.xlu0 %v923
    %v925 = vpop.xlane.xlu0 %924
    %v926 = vsel %vm226, %v922, 0.0
    %927 = vadd.xlane.f32.xlu0 %v926
    %v928 = vpop.xlane.xlu0 %927
    %v929 = vrcp.pop %v925
    %v930 = vrcp.pop %v928
    %v931 = vmul.f32 %v920, %v929
    %v932 = vmul.f32 %v922, %v930
    %v933 = vpack.c.bf16 %v931, %v931
    %v934 = vpack.c.bf16 %v932, %v932
    %935 = vrot.lane.b32.xlu0 %v746, 48
    %v936 = vpop.permute.xlu0 %935
    %v938 = vsel %vm226, %v933, 0
    %v941 = vsel %vm256, %v936, 0
    %943 = vmatpush.bf16.msra.mxu0 0
    %944 = vmatpush.bf16.msra.mxu0 0
    %945 = vmatpush.bf16.msra.mxu0 0
    %946 = vmatpush.bf16.msra.mxu0 0
    %947 = vmatpush.bf16.msra.mxu0 0
    %948 = vmatpush.bf16.msra.mxu0 0
    %949 = vmatpush.bf16.msra.mxu0 0
    %950 = vmatpush.bf16.msra.mxu0 %v941
    %951 = vmatmul.bf16.gmra.mxu0 %v938
    %v952 = vpop.f32.mrf.mxu0
    %v953 = vadd.f32 0.0, %v952
    %v954 = vpop.f32.mrf.mxu0
    %955 = vdwg.mxu0
    %956 = vrot.lane.b32.xlu0 %v770, 48
    %v957 = vpop.permute.xlu0 %956
    %v959 = vsel %vm226, %v934, 0
    %v962 = vsel %vm256, %v957, 0
    %964 = vmatpush.bf16.msra.mxu0 0
    %965 = vmatpush.bf16.msra.mxu0 0
    %966 = vmatpush.bf16.msra.mxu0 0
    %967 = vmatpush.bf16.msra.mxu0 0
    %968 = vmatpush.bf16.msra.mxu0 0
    %969 = vmatpush.bf16.msra.mxu0 0
    %970 = vmatpush.bf16.msra.mxu0 0
    %971 = vmatpush.bf16.msra.mxu0 %v962
    %972 = vmatmul.bf16.gmra.mxu0 %v959
    %v973 = vpop.f32.mrf.mxu0
    %v974 = vadd.f32 0.0, %v973
    %v975 = vpop.f32.mrf.mxu0
    %976 = vdwg.mxu0
    %v977 = vpack.c.bf16 %v974, %v953
    %v980 = vunpack.c.l.b16 %v701
    %v981 = vunpack.c.l.b16 %v702
    %v982 = vpack.c.b16 %v981, %v980
    %v985 = vsel %vm182, %v977, 0
    %987 = vmatpush.bf16.msra.mxu0 0
    %988 = vmatpush.bf16.msra.mxu0 0
    %989 = vmatpush.bf16.msra.mxu0 0
    %990 = vmatpush.bf16.msra.mxu0 0
    %991 = vmatpush.bf16.msra.mxu0 0
    %992 = vmatpush.bf16.msra.mxu0 0
    %993 = vmatpush.bf16.msra.mxu0 0
    %994 = vmatpush.bf16.msra.mxu0 %v982
    %995 = vmatmul.bf16.gmra.mxu0 %v985
    %v996 = vpop.f32.mrf.mxu0
    %v997 = vadd.f32 0.0, %v996
    %v998 = vpop.f32.mrf.mxu0
    %v999 = vadd.f32 0.0, %v998
    %1000 = vdwg.mxu0
    %v1003 = vunpack.c.l.b16 %v699
    %v1004 = vunpack.c.l.b16 %v700
    %v1005 = vpack.c.b16 %v1004, %v1003
    %v1008 = vsel %vm182, %v858, 0
    %1010 = vmatpush.bf16.msra.mxu0 0
    %1011 = vmatpush.bf16.msra.mxu0 0
    %1012 = vmatpush.bf16.msra.mxu0 0
    %1013 = vmatpush.bf16.msra.mxu0 0
    %1014 = vmatpush.bf16.msra.mxu0 0
    %1015 = vmatpush.bf16.msra.mxu0 0
    %1016 = vmatpush.bf16.msra.mxu0 0
    %1017 = vmatpush.bf16.msra.mxu0 %v1005
    %1018 = vmatmul.bf16.gmra.mxu0 %v1008
    %v1019 = vpop.f32.mrf.mxu0
    %v1020 = vadd.f32 %v997, %v1019
    %v1021 = vpop.f32.mrf.mxu0
    %v1022 = vadd.f32 %v999, %v1021
    %1023 = vdwg.mxu0
    %s1024 = scalar_lea.vmem %s7, 1
    %v1025 = vld [vmem:[%s1024] sm:$0x1]
    %v1027 = vperm.slane %v1025, 0
    %v1029 = vadd.f32 %v1020, %v1027
    %v1030 = vadd.f32 %v1022, %v1027
    %v1031 = vadd.f32 %v691, %v1029
    %v1032 = vadd.f32 %v692, %v1030
    %s1033 = scalar_lea.vmem %s8, 1
    %v1034 = vld [vmem:[%s1033] sm:$0x1]
    %s1035 = scalar_lea.vmem %s9, 1
    %v1036 = vld [vmem:[%s1035] sm:$0x1]
    %v1037 = vsel %vm67, %v1031, 0.0
    %1038 = vadd.xlane.f32.xlu0 %v1037
    %v1039 = vpop.xlane.xlu0 %1038
    %v1040 = vsel %vm67, %v1032, 0.0
    %1041 = vadd.xlane.f32.xlu0 %v1040
    %v1042 = vpop.xlane.xlu0 %1041
    %v1043 = vmul.f32 %v1039, %v80
    %v1044 = vmul.f32 %v1042, %v80
    %v1045 = vsub.f32 %v1031, %v1043
    %v1046 = vsub.f32 %v1032, %v1044
    %v1047 = vmul.f32 %v1045, %v1045
    %v1048 = vmul.f32 %v1046, %v1046
    %v1049 = vsel %vm67, %v1047, 0.0
    %1050 = vadd.xlane.f32.xlu0 %v1049
    %v1051 = vpop.xlane.xlu0 %1050
    %v1052 = vsel %vm67, %v1048, 0.0
    %1053 = vadd.xlane.f32.xlu0 %v1052
    %v1054 = vpop.xlane.xlu0 %1053
    %v1055 = vmul.f32 %v1051, %v80
    %v1056 = vmul.f32 %v1054, %v80
    %v1057 = vadd.f32 %v1055, 1e-05
    %v1058 = vadd.f32 %v1056, 1e-05
    %v1059 = vrsqrt.pop %v1057
    %v1060 = vmul.f32 %v1059, %v1057
    %v1061 = vmul.f32 %v1060, %v1059
    %v1062 = vmul.f32 0.5, %v1061
    %v1063 = vsub.f32 1.5, %v1062
    %v1064 = vmul.f32 %v1059, %v1063
    %vm1065 = vweird.f32 %v1057
    %vm1066 = vweird.f32 %v1059
    %vm1067 = vmor %vm1065, %vm1066
    %v1068 = vsel %vm1067, %v1059, %v1064
    %v1069 = vrsqrt.pop %v1058
    %v1070 = vmul.f32 %v1069, %v1058
    %v1071 = vmul.f32 %v1070, %v1069
    %v1072 = vmul.f32 0.5, %v1071
    %v1073 = vsub.f32 1.5, %v1072
    %v1074 = vmul.f32 %v1069, %v1073
    %vm1075 = vweird.f32 %v1058
    %vm1076 = vweird.f32 %v1069
    %vm1077 = vmor %vm1075, %vm1076
    %v1078 = vsel %vm1077, %v1069, %v1074
    %v1079 = vmul.f32 %v1045, %v1068
    %v1080 = vmul.f32 %v1046, %v1078
    %v1082 = vperm.slane %v1034, 0
    %v1084 = vmul.f32 %v1079, %v1082
    %v1085 = vmul.f32 %v1080, %v1082
    %v1087 = vperm.slane %v1036, 0
    %v1089 = vadd.f32 %v1084, %v1087
    %v1090 = vadd.f32 %v1085, %v1087
    %v1091 = vpack.c.bf16 %v1090, %v1089
    %s1092 = scalar_lea.vmem %s10, 16
    %v1093 = vld [vmem:[%s1092] sm:$0xf]
    %v1094 = vld [vmem:[%s1092 + $0x4] sm:$0xf]
    %v1095 = vld [vmem:[%s1092 + $0x8] sm:$0xf]
    %v1096 = vld [vmem:[%s1092 + $0xc] sm:$0xf]
    %s1097 = scalar_lea.vmem %s11, 1
    %v1098 = vld [vmem:[%s1097] sm:$0x1]
    %v1100 = vperm.slane %v1098, 0
    %v1106 = vunpack.c.l.b16 %v1093
    %v1107 = vunpack.c.l.b16 %v1094
    %v1108 = vunpack.c.l.b16 %v1095
    %v1109 = vunpack.c.l.b16 %v1096
    %v1110 = vpack.c.b16 %v1107, %v1106
    %v1111 = vpack.c.b16 %v1109, %v1108
    %v1115 = vsel %vm67, %v1091, 0
    %1117 = vmatpush.bf16.msra.mxu0 0
    %1118 = vmatpush.bf16.msra.mxu0 0
    %1119 = vmatpush.bf16.msra.mxu0 0
    %1120 = vmatpush.bf16.msra.mxu0 0
    %1121 = vmatpush.bf16.msra.mxu0 0
    %1122 = vmatpush.bf16.msra.mxu0 0
    %1123 = vmatpush.bf16.msra.mxu0 %v1111
    %1124 = vmatpush.bf16.msra.mxu0 %v1110
    %1125 = vmatmul.bf16.gmra.mxu0 %v1115
    %v1126 = vpop.f32.mrf.mxu0
    %v1127 = vadd.f32 %v1100, %v1126
    %v1128 = vpop.f32.mrf.mxu0
    %v1129 = vadd.f32 %v1100, %v1128
    %1130 = vdwg.mxu0
    %v1131 = vmul.f32 %v1127, %v1127
    %v1132 = vmul.f32 %v1129, %v1129
    %v1133 = vmul.f32 %v1127, %v1131
    %v1134 = vmul.f32 %v1129, %v1132
    %v1135 = vmul.f32 %v1133, 0.044715
    %v1136 = vmul.f32 %v1134, 0.044715
    %v1137 = vadd.f32 %v1127, %v1135
    %v1138 = vadd.f32 %v1129, %v1136
    %v1139 = vmul.f32 %v1137, 0.7978846
    %v1140 = vmul.f32 %v1138, 0.7978846
    %v1141 = vtanh.pop %v1139
    %v1142 = vtanh.pop %v1140
    %v1143 = vadd.f32 %v1141, 1.0
    %v1144 = vadd.f32 %v1142, 1.0
    %v1145 = vmul.f32 %v1143, 0.5
    %v1146 = vmul.f32 %v1144, 0.5
    %v1147 = vmul.f32 %v1127, %v1145
    %v1148 = vmul.f32 %v1129, %v1146
    %v1149 = vpack.c.bf16 %v1148, %v1147
    %s1150 = scalar_lea.vmem %s12, 32
    %v1151 = vld [vmem:[%s1150] sm:$0xf]
    %v1152 = vld [vmem:[%s1150 + $0x4] sm:$0xf]
    %v1153 = vld [vmem:[%s1150 + $0x8] sm:$0xf]
    %v1154 = vld [vmem:[%s1150 + $0xc] sm:$0xf]
    %v1155 = vld [vmem:[%s1150 + $0x10] sm:$0xf]
    %v1156 = vld [vmem:[%s1150 + $0x14] sm:$0xf]
    %v1157 = vld [vmem:[%s1150 + $0x18] sm:$0xf]
    %v1158 = vld [vmem:[%s1150 + $0x1c] sm:$0xf]
    %s1159 = scalar_lea.vmem %s13, 1
    %v1160 = vld [vmem:[%s1159] sm:$0x1]
    %v1162 = vperm.slane %v1160, 0
    %v1172 = vunpack.c.l.b16 %v1151
    %v1173 = vunpack.c.l.b16 %v1152
    %v1174 = vunpack.c.l.b16 %v1153
    %v1175 = vunpack.c.l.b16 %v1154
    %v1176 = vunpack.c.l.b16 %v1155
    %v1177 = vunpack.c.l.b16 %v1156
    %v1178 = vunpack.c.l.b16 %v1157
    %v1179 = vunpack.c.l.b16 %v1158
    %v1180 = vpack.c.b16 %v1173, %v1172
    %v1181 = vpack.c.b16 %v1175, %v1174
    %v1182 = vpack.c.b16 %v1177, %v1176
    %v1183 = vpack.c.b16 %v1179, %v1178
    %v1189 = vsel %vm617, %v1149, 0
    %1191 = vmatpush.bf16.msra.mxu0 0
    %1192 = vmatpush.bf16.msra.mxu0 0
    %1193 = vmatpush.bf16.msra.mxu0 0
    %1194 = vmatpush.bf16.msra.mxu0 0
    %1195 = vmatpush.bf16.msra.mxu0 %v1183
    %1196 = vmatpush.bf16.msra.mxu0 %v1182
    %1197 = vmatpush.bf16.msra.mxu0 %v1181
    %1198 = vmatpush.bf16.msra.mxu0 %v1180
    %1199 = vmatmul.bf16.gmra.mxu0 %v1189
    %v1200 = vpop.f32.mrf.mxu0
    %v1201 = vadd.f32 %v1162, %v1200
    %v1202 = vpop.f32.mrf.mxu0
    %v1203 = vadd.f32 %v1162, %v1202
    %1204 = vdwg.mxu0
    %v1205 = vadd.f32 %v1089, %v1201
    %v1206 = vadd.f32 %v1090, %v1203
    %s1207 = scalar_lea.vmem %s14, 1
    %v1208 = vld [vmem:[%s1207] sm:$0x1]
    %s1209 = scalar_lea.vmem %s15, 1
    %v1210 = vld [vmem:[%s1209] sm:$0x1]
    %v1211 = vsel %vm67, %v1205, 0.0
    %1212 = vadd.xlane.f32.xlu0 %v1211
    %v1213 = vpop.xlane.xlu0 %1212
    %v1214 = vsel %vm67, %v1206, 0.0
    %1215 = vadd.xlane.f32.xlu0 %v1214
    %v1216 = vpop.xlane.xlu0 %1215
    %v1217 = vmul.f32 %v1213, %v80
    %v1218 = vmul.f32 %v1216, %v80
    %v1219 = vsub.f32 %v1205, %v1217
    %v1220 = vsub.f32 %v1206, %v1218
    %v1221 = vmul.f32 %v1219, %v1219
    %v1222 = vmul.f32 %v1220, %v1220
    %v1223 = vsel %vm67, %v1221, 0.0
    %1224 = vadd.xlane.f32.xlu0 %v1223
    %v1225 = vpop.xlane.xlu0 %1224
    %v1226 = vsel %vm67, %v1222, 0.0
    %1227 = vadd.xlane.f32.xlu0 %v1226
    %v1228 = vpop.xlane.xlu0 %1227
    %v1229 = vmul.f32 %v1225, %v80
    %v1230 = vmul.f32 %v1228, %v80
    %v1231 = vadd.f32 %v1229, 1e-05
    %v1232 = vadd.f32 %v1230, 1e-05
    %v1233 = vrsqrt.pop %v1231
    %v1234 = vmul.f32 %v1233, %v1231
    %v1235 = vmul.f32 %v1234, %v1233
    %v1236 = vmul.f32 0.5, %v1235
    %v1237 = vsub.f32 1.5, %v1236
    %v1238 = vmul.f32 %v1233, %v1237
    %vm1239 = vweird.f32 %v1231
    %vm1240 = vweird.f32 %v1233
    %vm1241 = vmor %vm1239, %vm1240
    %v1242 = vsel %vm1241, %v1233, %v1238
    %v1243 = vrsqrt.pop %v1232
    %v1244 = vmul.f32 %v1243, %v1232
    %v1245 = vmul.f32 %v1244, %v1243
    %v1246 = vmul.f32 0.5, %v1245
    %v1247 = vsub.f32 1.5, %v1246
    %v1248 = vmul.f32 %v1243, %v1247
    %vm1249 = vweird.f32 %v1232
    %vm1250 = vweird.f32 %v1243
    %vm1251 = vmor %vm1249, %vm1250
    %v1252 = vsel %vm1251, %v1243, %v1248
    %v1253 = vmul.f32 %v1219, %v1242
    %v1254 = vmul.f32 %v1220, %v1252
    %v1256 = vperm.slane %v1208, 0
    %v1258 = vmul.f32 %v1253, %v1256
    %v1259 = vmul.f32 %v1254, %v1256
    %v1261 = vperm.slane %v1210, 0
    %v1263 = vadd.f32 %v1258, %v1261
    %v1264 = vadd.f32 %v1259, %v1261
    %v1265 = vxor.u32 %v1263, 2147483648
    %v1266 = vxor.u32 %v1264, 2147483648
    %v1267 = vmul.f32 %v1265, 1.442695
    %v1268 = vpow.pop %v1267
    %v1269 = vmul.f32 %v1266, 1.442695
    %v1270 = vpow.pop %v1269
    %v1271 = vadd.f32 %v1268, 1.0
    %v1272 = vadd.f32 %v1270, 1.0
    %v1273 = vrcp.pop %v1271
    %v1274 = vmul.f32 %v1271, %v1273
    %v1275 = vsub.f32 1.0, %v1274
    %v1276 = vmul.f32 %v1273, %v1275
    %v1277 = vadd.f32 %v1273, %v1276
    %vm1278 = vweird.f32 %v1271
    %vm1279 = vweird.f32 %v1273
    %vm1280 = vmor %vm1278, %vm1279
    %v1281 = vsel %vm1280, %v1273, %v1277
    %v1282 = vand.u32 2147483647, %v1271
    %vm1283 = vcmp.eq.f32.partialorder %v1282, 8.507059e+37
    %v1284 = vand.u32 %v1271, 2147483648
    %v1285 = vor.u32 1.1754944e-38, %v1284
    %v1286 = vsel %vm1283, %v1285, %v1281
    %v1287 = vmul.f32 1.0, %v1286
    %v1288 = vrcp.pop %v1272
    %v1289 = vmul.f32 %v1272, %v1288
    %v1290 = vsub.f32 1.0, %v1289
    %v1291 = vmul.f32 %v1288, %v1290
    %v1292 = vadd.f32 %v1288, %v1291
    %vm1293 = vweird.f32 %v1272
    %vm1294 = vweird.f32 %v1288
    %vm1295 = vmor %vm1293, %vm1294
    %v1296 = vsel %vm1295, %v1288, %v1292
    %v1297 = vand.u32 2147483647, %v1272
    %vm1298 = vcmp.eq.f32.partialorder %v1297, 8.507059e+37
    %v1299 = vand.u32 %v1272, 2147483648
    %v1300 = vor.u32 1.1754944e-38, %v1299
    %v1301 = vsel %vm1298, %v1300, %v1296
    %v1302 = vmul.f32 1.0, %v1301
    %1303 = vst.msk [vmem:[#allocation2] sm:$0xff] %vm67, %v1287
    %1304 = vst.msk [vmem:[#allocation2 + $0x8] sm:$0xff] %vm67, %v1302
    // Predicated region
    $region66: #{model_forward.1} parent=1 // pred_check
      _
    $region67: #{model_forward.1} parent=1 // pred_check_branch
      %1306 = sbr.rel (0) target = $region69
    $region68: #{model_forward.1} parent=1 // pred_region
      %1308 = vsyncadd [#allocation3], 0
      %s1309 = sshll.u32 [#allocation2], 4
      %s1310 = int_to_ptr.vmem [resolvable:$true] %s1309
      %s1311 = sshll.u32 %s16, 4
      %s1312 = int_to_ptr.hbm [resolvable:$true] %s1311
      %1317 = dma.vmem_to_hbm [thread:$0]  %s1310, 256, %s1312, [#allocation3], 128, 128, 8
    $region69: #{model_forward.1} parent=1 // pred_fallthru
      _
    // Predicated region
    $region70: #{model_forward.1} parent=1 // pred_check
      _
    $region71: #{model_forward.1} parent=1 // pred_check_branch
      %1319 = sbr.rel (0) target = $region73
    $region72: #{model_forward.1} parent=1 // pred_region
      %1321 = dma.done [#allocation3], 256
    $region73: #{model_forward.1} parent=1 // pred_fallthru
      _
    %1322 = vsyncpa [#allocation3], 1

</llo_original>
